<compile_context>
chip_gen: v7x
topology: tpu7x:2x2x1
jax: 0.10.0
libtpu: 0.0.40
codegen_flags: <defaults>
</compile_context>

<pallas_src>
import math
import jax
import jax.numpy as jnp
from jax.experimental import pallas as pl
from jax.experimental.pallas import tpu as pltpu

# ----------------------------- config -----------------------------
VOCAB = 50
VOCAB_PAD = 64          # padded rows (never indexed) for clean sublane layout
PAD_ID = 0
HIDDEN = 32
N_HEADS = 4
HEAD_DIM = HIDDEN // N_HEADS
FF = 64
N_LAYERS = 2
SEQ = 8
BATCH = 2
BS = BATCH * SEQ        # 16 rows folded into the sublane dim
HB = N_HEADS * BS       # 64 head-major rows
EPS = 1e-5

BLK_SHIFT = SEQ.bit_length() - 1          # log2(SEQ); r>>BLK_SHIFT encodes (head, batch)
assert (1 << BLK_SHIFT) == SEQ, "SEQ must be a power of two"

# ---------------- packed-buffer layout (static offsets) ----------------
W_LANES = 3 * HIDDEN                       # 96 (widest matmul weight = wqkv)
W_EMB_ROWS = VOCAB_PAD                     # tok_emb rows
W_LAYER_ROWS = HIDDEN + HIDDEN + HIDDEN + FF   # wqkv(32)+wo(32)+w1(32)+w2(64) = 160
W_ROWS = W_EMB_ROWS + N_LAYERS * W_LAYER_ROWS  # 384 (multiple of 16 -> bf16 tile aligned)

C_LANES = 3 * HIDDEN                       # 96 (bqkv width)
C_POS_ROWS = BS                            # pre-tiled positional embedding rows
C_LAYER_ROWS = 8                           # bqkv,bo,ln1g,ln1b,b1,b2,ln2g,ln2b
C_FC_ROW = C_POS_ROWS + N_LAYERS * C_LAYER_ROWS   # 32: fc_w row; 33: fc_b row
C_ROWS = C_FC_ROW + 8                      # 40

DYN_ROWS = 8 + BS                          # row 0: ids row; rows 8..: [y_col | ids_col]


# ----------------------------- kernel -----------------------------
def _layernorm(x, g, b):
    mu = jnp.mean(x, axis=-1, keepdims=True)
    var = jnp.mean((x - mu) ** 2, axis=-1, keepdims=True)
    return (x - mu) * jax.lax.rsqrt(var + EPS) * g + b


def disc_kernel(dyn_ref, wmat_ref, consts_ref, out_ref):
    f32 = jnp.float32
    bf16 = jnp.bfloat16
    H, F, NH, DH = HIDDEN, FF, N_HEADS, HEAD_DIM

    ids_row = dyn_ref[0:1, :]               # (1, BS) f32 token ids
    y_col = dyn_ref[8:8 + BS, 0:1]          # (BS, 1) labels at CLS rows, 0 elsewhere
    ids_col = dyn_ref[8:8 + BS, 1:2]        # (BS, 1) token ids (column form)

    # ---- embeddings: one-hot gather on the MXU (bf16) + pre-tiled positional add ----
    onehot = (ids_col.astype(jnp.int32) ==
              jax.lax.broadcasted_iota(jnp.int32, (BS, VOCAB_PAD), 1))
    onehot = onehot.astype(f32).astype(bf16)                        # (BS, VOCAB_PAD)
    tok_emb = wmat_ref[0:VOCAB_PAD, 0:H]                            # (VOCAB_PAD, H) bf16
    x = jnp.dot(onehot, tok_emb, preferred_element_type=f32)        # (BS, H) f32
    x = x + consts_ref[0:BS, 0:H]                                   # pos already tiled
    # TODO(synk): dropout is identity (eval mode)

    # ---- additive attention bias for head-major layout (built once, reused) ----
    # row/col index r = head*BS + batch*SEQ + pos ; r>>log2(SEQ) encodes (head,batch)
    ids_t = jnp.concatenate([ids_row] * NH, axis=1)                 # (1, HB)
    key_ok = ids_t != f32(PAD_ID)
    ri = jax.lax.broadcasted_iota(jnp.int32, (HB, HB), 0) >> BLK_SHIFT
    ci = jax.lax.broadcasted_iota(jnp.int32, (HB, HB), 1) >> BLK_SHIFT
    bias = jnp.where((ri == ci) & key_ok, f32(0.0), f32(-1e9))      # (HB, HB)

    scale = f32(1.0 / math.sqrt(DH))

    for l in range(N_LAYERS):                                       # static unroll
        wb = W_EMB_ROWS + l * W_LAYER_ROWS
        cb = C_POS_ROWS + l * C_LAYER_ROWS
        wqkv = wmat_ref[wb:wb + H, 0:3 * H]                          # (H, 3H)  bf16
        wo = wmat_ref[wb + H:wb + 2 * H, 0:H]                        # (H, H)   bf16
        w1 = wmat_ref[wb + 2 * H:wb + 3 * H, 0:F]                    # (H, F)   bf16
        w2 = wmat_ref[wb + 3 * H:wb + 3 * H + F, 0:H]                # (F, H)   bf16
        bqkv = consts_ref[cb + 0:cb + 1, 0:3 * H]
        bo = consts_ref[cb + 1:cb + 2, 0:H]
        ln1g = consts_ref[cb + 2:cb + 3, 0:H]
        ln1b = consts_ref[cb + 3:cb + 4, 0:H]
        b1 = consts_ref[cb + 4:cb + 5, 0:F]
        b2 = consts_ref[cb + 5:cb + 6, 0:H]
        ln2g = consts_ref[cb + 6:cb + 7, 0:H]
        ln2b = consts_ref[cb + 7:cb + 8, 0:H]

        # ---- fused QKV projection: one (BS,H)x(H,3H) bf16 matmul ----
        qkv = jnp.dot(x.astype(bf16), wqkv, preferred_element_type=f32) + bqkv

        # ---- pack heads on the sublane axis: (NH*BS, DH) ----
        q = jnp.concatenate([qkv[:, h * DH:(h + 1) * DH] for h in range(NH)], axis=0)
        k = jnp.concatenate([qkv[:, H + h * DH:H + (h + 1) * DH] for h in range(NH)], axis=0)
        v = jnp.concatenate([qkv[:, 2 * H + h * DH:2 * H + (h + 1) * DH] for h in range(NH)], axis=0)

        # ---- all heads/sequences in ONE score matmul; block-diag mask separates them ----
        s = jax.lax.dot_general(q.astype(bf16), k.astype(bf16),
                                (((1,), (1,)), ((), ())),
                                preferred_element_type=f32) * scale + bias   # (HB, HB)
        m = jnp.max(s, axis=-1, keepdims=True)
        p = jnp.exp(s - m)
        p = p * pl.reciprocal(jnp.sum(p, axis=-1, keepdims=True), approx=True)
        ctx = jnp.dot(p.astype(bf16), v.astype(bf16),
                      preferred_element_type=f32)                            # (HB, DH)

        # ---- unpack heads back to the lane axis: (BS, H) ----
        ctx = jnp.concatenate([ctx[h * BS:(h + 1) * BS, :] for h in range(NH)], axis=1)
        attn = jnp.dot(ctx.astype(bf16), wo, preferred_element_type=f32) + bo
        x = _layernorm(x + attn, ln1g, ln1b)

        # ---- feed-forward (bf16 MXU, f32 accum) ----
        ff = jnp.maximum(
            jnp.dot(x.astype(bf16), w1, preferred_element_type=f32) + b1, 0.0)
        ff = jnp.dot(ff.astype(bf16), w2, preferred_element_type=f32) + b2
        x = _layernorm(x + ff, ln2g, ln2b)

    # ---- fc_out over ALL rows (VPU mul + lane reduce); no sublane gather ----
    fc_w = consts_ref[C_FC_ROW:C_FC_ROW + 1, 0:H]                    # (1, H)
    fc_b = consts_ref[C_FC_ROW + 1:C_FC_ROW + 2, 0:1]                # (1, 1)
    z = jnp.sum(x * fc_w, axis=-1, keepdims=True) + fc_b             # (BS, 1)

    # ---- BCEWithLogitsLoss, mean over the BATCH CLS rows (iota mask select) ----
    row = jax.lax.broadcasted_iota(jnp.int32, (BS, 1), 0)
    cls = ((row & (SEQ - 1)) == 0).astype(jnp.float32)               # rows 0, SEQ, ...
    per = jnp.maximum(z, 0.0) - z * y_col + jnp.log(1.0 + jnp.exp(-jnp.abs(z)))
    loss = jnp.sum(per * cls, keepdims=True) * jnp.float32(1.0 / BATCH)   # (1, 1)

    out_ref[...] = jnp.concatenate([z, loss], axis=0)                # (BS+1, 1)


# ----------------------------- wrapper -----------------------------
@jax.jit
def discriminator_forward(x_ids, y, wmat, consts):
    ids_row = x_ids.reshape(1, BS).astype(jnp.float32)
    ids_col = x_ids.reshape(BS, 1).astype(jnp.float32)
    y_col = jnp.zeros((BATCH, SEQ), jnp.float32).at[:, 0].set(
        y.astype(jnp.float32)).reshape(BS, 1)

    dyn = jnp.zeros((DYN_ROWS, BS), jnp.float32)
    dyn = dyn.at[0:1, :].set(ids_row)
    dyn = dyn.at[8:8 + BS, 0:1].set(y_col)
    dyn = dyn.at[8:8 + BS, 1:2].set(ids_col)

    vmem = pl.BlockSpec(memory_space=pltpu.MemorySpace.VMEM)
    out = pl.pallas_call(
        disc_kernel,
        out_shape=jax.ShapeDtypeStruct((BS + 1, 1), jnp.float32),
        in_specs=[vmem, vmem, vmem],
        out_specs=vmem,
    )(dyn, wmat, consts)

    logit = out[0:BS:SEQ, 0]          # CLS logits, shape (BATCH,)
    loss = out[BS, 0]
    return logit, loss


# ----------------------------- params -----------------------------
def init_params(key):
    keys = jax.random.split(key, 8)

    def nrm(k, shp, s=0.02):
        return jax.random.normal(k, shp, jnp.float32) * s

    L, H, F = N_LAYERS, HIDDEN, FF
    tok_emb = nrm(keys[0], (VOCAB_PAD, H)).at[PAD_ID].set(0.0)  # pad row zeroed
    pos_emb = nrm(keys[1], (SEQ, H))
    wqkv = nrm(keys[2], (L, H, 3 * H))
    bqkv = jnp.zeros((L, 1, 3 * H), jnp.float32)
    wo = nrm(keys[3], (L, H, H))
    bo = jnp.zeros((L, 1, H), jnp.float32)
    ln1g = jnp.ones((L, 1, H), jnp.float32)
    ln1b = jnp.zeros((L, 1, H), jnp.float32)
    w1 = nrm(keys[4], (L, H, F))
    b1 = jnp.zeros((L, 1, F), jnp.float32)
    w2 = nrm(keys[5], (L, F, H))
    b2 = jnp.zeros((L, 1, H), jnp.float32)
    ln2g = jnp.ones((L, 1, H), jnp.float32)
    ln2b = jnp.zeros((L, 1, H), jnp.float32)
    fc_w = nrm(keys[6], (1, H))
    fc_b = jnp.zeros((1, 1), jnp.float32)
    return (tok_emb, pos_emb, wqkv, bqkv, wo, bo, ln1g, ln1b,
            w1, b1, w2, b2, ln2g, ln2b, fc_w, fc_b)


def pack_params(params):
    """One-time packing: bf16 matmul-weight slab + f32 bias/LN/pos/fc slab."""
    (tok_emb, pos_emb, wqkv, bqkv, wo, bo, ln1g, ln1b,
     w1, b1, w2, b2, ln2g, ln2b, fc_w, fc_b) = params
    H, F = HIDDEN, FF

    wmat = jnp.zeros((W_ROWS, W_LANES), jnp.float32)
    wmat = wmat.at[0:VOCAB_PAD, 0:H].set(tok_emb)
    consts = jnp.zeros((C_ROWS, C_LANES), jnp.float32)
    consts = consts.at[0:BS, 0:H].set(jnp.tile(pos_emb, (BATCH, 1)))  # pre-tiled pos

    for l in range(N_LAYERS):
        wb = W_EMB_ROWS + l * W_LAYER_ROWS
        wmat = wmat.at[wb:wb + H, 0:3 * H].set(wqkv[l])
        wmat = wmat.at[wb + H:wb + 2 * H, 0:H].set(wo[l])
        wmat = wmat.at[wb + 2 * H:wb + 3 * H, 0:F].set(w1[l])
        wmat = wmat.at[wb + 3 * H:wb + 3 * H + F, 0:H].set(w2[l])

        cb = C_POS_ROWS + l * C_LAYER_ROWS
        consts = consts.at[cb + 0, 0:3 * H].set(bqkv[l, 0])
        consts = consts.at[cb + 1, 0:H].set(bo[l, 0])
        consts = consts.at[cb + 2, 0:H].set(ln1g[l, 0])
        consts = consts.at[cb + 3, 0:H].set(ln1b[l, 0])
        consts = consts.at[cb + 4, 0:F].set(b1[l, 0])
        consts = consts.at[cb + 5, 0:H].set(b2[l, 0])
        consts = consts.at[cb + 6, 0:H].set(ln2g[l, 0])
        consts = consts.at[cb + 7, 0:H].set(ln2b[l, 0])

    consts = consts.at[C_FC_ROW, 0:H].set(fc_w[0])
    consts = consts.at[C_FC_ROW + 1, 0].set(fc_b[0, 0])
    return wmat.astype(jnp.bfloat16), consts


# ----------------------------- main -----------------------------
if __name__ == "__main__":
    key = jax.random.PRNGKey(0)
    kp, kx, ky = jax.random.split(key, 3)
    params = init_params(kp)
    wmat, consts = pack_params(params)

    x = jax.random.randint(kx, (BATCH, SEQ), 1, VOCAB)   # token ids (non-pad)
    x = x.at[:, -2:].set(PAD_ID)                         # pad the tail -> exercises mask
    y = jax.random.bernoulli(ky, 0.5, (BATCH,)).astype(jnp.float32)

    logit, loss = discriminator_forward(x, y, wmat, consts)
    jax.block_until_ready((logit, loss))
    print("KERNEL_OK")
</pallas_src>

<mosaic_0001>
module attributes {stable_mosaic.version = 11 : i64} {
  func.func @disc_kernel(%arg0: memref<24x16xf32, #tpu.memory_space<vmem>>, %arg1: memref<384x96xbf16, #tpu.memory_space<vmem>>, %arg2: memref<40x96xf32, #tpu.memory_space<vmem>>, %arg3: memref<17x1xf32, #tpu.memory_space<vmem>>) attributes {dimension_semantics = [], scalar_prefetch = 0 : i64, scratch_operands = 0 : i64, tpu.core_type = #tpu.core_type<tc>} {
    %c0 = arith.constant 0 : index
    %c0_0 = arith.constant 0 : index
    %0 = vector.load %arg0[%c0, %c0_0] : memref<24x16xf32, #tpu.memory_space<vmem>>, vector<1x16xf32>
    %c8 = arith.constant 8 : index
    %c0_1 = arith.constant 0 : index
    %1 = vector.load %arg0[%c8, %c0_1] : memref<24x16xf32, #tpu.memory_space<vmem>>, vector<16x1xf32>
    %c8_2 = arith.constant 8 : index
    %c1 = arith.constant 1 : index
    %2 = vector.load %arg0[%c8_2, %c1] : memref<24x16xf32, #tpu.memory_space<vmem>>, vector<16x1xf32>
    %3 = arith.fptosi %2 : vector<16x1xf32> to vector<16x1xi32>
    %4 = tpu.iota {dimensions = array<i32: 1>} : vector<16x64xi32>
    %5 = vector.broadcast %3 : vector<16x1xi32> to vector<16x64xi32>
    %6 = arith.cmpi eq, %5, %4 : vector<16x64xi32>
    %7 = arith.extui %6 : vector<16x64xi1> to vector<16x64xi32>
    %8 = arith.sitofp %7 : vector<16x64xi32> to vector<16x64xf32>
    %9 = arith.truncf %8 : vector<16x64xf32> to vector<16x64xbf16>
    %c0_3 = arith.constant 0 : index
    %c0_4 = arith.constant 0 : index
    %10 = vector.load %arg1[%c0_3, %c0_4] : memref<384x96xbf16, #tpu.memory_space<vmem>>, vector<64x32xbf16>
    %cst = arith.constant dense<0.000000e+00> : vector<16x32xf32>
    %11 = tpu.matmul %9, %10, %cst {dimension_numbers = #tpu.dot_dimension_numbers<[1], [0], [0], [1], [0, 0, 1, 1], [], []>} : vector<16x64xbf16>, vector<64x32xbf16>, vector<16x32xf32> -> vector<16x32xf32>
    %c0_5 = arith.constant 0 : index
    %c0_6 = arith.constant 0 : index
    %12 = vector.load %arg2[%c0_5, %c0_6] : memref<40x96xf32, #tpu.memory_space<vmem>>, vector<16x32xf32>
    %13 = arith.addf %11, %12 : vector<16x32xf32>
    %14 = tpu.concatenate %0, %0, %0, %0 in 1 : vector<1x16xf32>, vector<1x16xf32>, vector<1x16xf32>, vector<1x16xf32> -> vector<1x64xf32>
    %cst_7 = arith.constant 0.000000e+00 : f32
    %15 = vector.broadcast %cst_7 : f32 to vector<1x64xf32>
    %16 = arith.cmpf one, %14, %15 : vector<1x64xf32>
    %17 = tpu.iota {dimensions = array<i32: 0>} : vector<64x64xi32>
    %c3_i32 = arith.constant 3 : i32
    %18 = vector.broadcast %c3_i32 : i32 to vector<64x64xi32>
    %19 = arith.shrsi %17, %18 : vector<64x64xi32>
    %20 = tpu.iota {dimensions = array<i32: 1>} : vector<64x64xi32>
    %c3_i32_8 = arith.constant 3 : i32
    %21 = vector.broadcast %c3_i32_8 : i32 to vector<64x64xi32>
    %22 = arith.shrsi %20, %21 : vector<64x64xi32>
    %23 = arith.cmpi eq, %19, %22 : vector<64x64xi32>
    %24 = vector.broadcast %16 : vector<1x64xi1> to vector<64x64xi1>
    %25 = arith.andi %23, %24 : vector<64x64xi1>
    %cst_9 = arith.constant 0.000000e+00 : f32
    %cst_10 = arith.constant -1.000000e+09 : f32
    %26 = vector.broadcast %cst_9 : f32 to vector<64x64xf32>
    %27 = vector.broadcast %cst_10 : f32 to vector<64x64xf32>
    %28 = arith.select %25, %26, %27 : vector<64x64xi1>, vector<64x64xf32>
    %c64 = arith.constant 64 : index
    %c0_11 = arith.constant 0 : index
    %29 = vector.load %arg1[%c64, %c0_11] : memref<384x96xbf16, #tpu.memory_space<vmem>>, vector<32x96xbf16>
    %c96 = arith.constant 96 : index
    %c0_12 = arith.constant 0 : index
    %30 = vector.load %arg1[%c96, %c0_12] : memref<384x96xbf16, #tpu.memory_space<vmem>>, vector<32x32xbf16>
    %c128 = arith.constant 128 : index
    %c0_13 = arith.constant 0 : index
    %31 = vector.load %arg1[%c128, %c0_13] : memref<384x96xbf16, #tpu.memory_space<vmem>>, vector<32x64xbf16>
    %c160 = arith.constant 160 : index
    %c0_14 = arith.constant 0 : index
    %32 = vector.load %arg1[%c160, %c0_14] : memref<384x96xbf16, #tpu.memory_space<vmem>>, vector<64x32xbf16>
    %c16 = arith.constant 16 : index
    %c0_15 = arith.constant 0 : index
    %33 = vector.load %arg2[%c16, %c0_15] : memref<40x96xf32, #tpu.memory_space<vmem>>, vector<1x96xf32>
    %c17 = arith.constant 17 : index
    %c0_16 = arith.constant 0 : index
    %34 = vector.load %arg2[%c17, %c0_16] : memref<40x96xf32, #tpu.memory_space<vmem>>, vector<1x32xf32>
    %c18 = arith.constant 18 : index
    %c0_17 = arith.constant 0 : index
    %35 = vector.load %arg2[%c18, %c0_17] : memref<40x96xf32, #tpu.memory_space<vmem>>, vector<1x32xf32>
    %c19 = arith.constant 19 : index
    %c0_18 = arith.constant 0 : index
    %36 = vector.load %arg2[%c19, %c0_18] : memref<40x96xf32, #tpu.memory_space<vmem>>, vector<1x32xf32>
    %c20 = arith.constant 20 : index
    %c0_19 = arith.constant 0 : index
    %37 = vector.load %arg2[%c20, %c0_19] : memref<40x96xf32, #tpu.memory_space<vmem>>, vector<1x64xf32>
    %c21 = arith.constant 21 : index
    %c0_20 = arith.constant 0 : index
    %38 = vector.load %arg2[%c21, %c0_20] : memref<40x96xf32, #tpu.memory_space<vmem>>, vector<1x32xf32>
    %c22 = arith.constant 22 : index
    %c0_21 = arith.constant 0 : index
    %39 = vector.load %arg2[%c22, %c0_21] : memref<40x96xf32, #tpu.memory_space<vmem>>, vector<1x32xf32>
    %c23 = arith.constant 23 : index
    %c0_22 = arith.constant 0 : index
    %40 = vector.load %arg2[%c23, %c0_22] : memref<40x96xf32, #tpu.memory_space<vmem>>, vector<1x32xf32>
    %41 = arith.truncf %13 : vector<16x32xf32> to vector<16x32xbf16>
    %cst_23 = arith.constant dense<0.000000e+00> : vector<16x96xf32>
    %42 = tpu.matmul %41, %29, %cst_23 {dimension_numbers = #tpu.dot_dimension_numbers<[1], [0], [0], [1], [0, 0, 1, 1], [], []>} : vector<16x32xbf16>, vector<32x96xbf16>, vector<16x96xf32> -> vector<16x96xf32>
    %43 = vector.broadcast %33 : vector<1x96xf32> to vector<16x96xf32>
    %44 = arith.addf %42, %43 : vector<16x96xf32>
    %45 = vector.extract_strided_slice %44 {offsets = [0, 0], sizes = [16, 8], strides = [1, 1]} : vector<16x96xf32> to vector<16x8xf32>
    %46 = vector.extract_strided_slice %44 {offsets = [0, 8], sizes = [16, 8], strides = [1, 1]} : vector<16x96xf32> to vector<16x8xf32>
    %47 = vector.extract_strided_slice %44 {offsets = [0, 16], sizes = [16, 8], strides = [1, 1]} : vector<16x96xf32> to vector<16x8xf32>
    %48 = vector.extract_strided_slice %44 {offsets = [0, 24], sizes = [16, 8], strides = [1, 1]} : vector<16x96xf32> to vector<16x8xf32>
    %49 = tpu.concatenate %45, %46, %47, %48 in 0 : vector<16x8xf32>, vector<16x8xf32>, vector<16x8xf32>, vector<16x8xf32> -> vector<64x8xf32>
    %50 = vector.extract_strided_slice %44 {offsets = [0, 32], sizes = [16, 8], strides = [1, 1]} : vector<16x96xf32> to vector<16x8xf32>
    %51 = vector.extract_strided_slice %44 {offsets = [0, 40], sizes = [16, 8], strides = [1, 1]} : vector<16x96xf32> to vector<16x8xf32>
    %52 = vector.extract_strided_slice %44 {offsets = [0, 48], sizes = [16, 8], strides = [1, 1]} : vector<16x96xf32> to vector<16x8xf32>
    %53 = vector.extract_strided_slice %44 {offsets = [0, 56], sizes = [16, 8], strides = [1, 1]} : vector<16x96xf32> to vector<16x8xf32>
    %54 = tpu.concatenate %50, %51, %52, %53 in 0 : vector<16x8xf32>, vector<16x8xf32>, vector<16x8xf32>, vector<16x8xf32> -> vector<64x8xf32>
    %55 = vector.extract_strided_slice %44 {offsets = [0, 64], sizes = [16, 8], strides = [1, 1]} : vector<16x96xf32> to vector<16x8xf32>
    %56 = vector.extract_strided_slice %44 {offsets = [0, 72], sizes = [16, 8], strides = [1, 1]} : vector<16x96xf32> to vector<16x8xf32>
    %57 = vector.extract_strided_slice %44 {offsets = [0, 80], sizes = [16, 8], strides = [1, 1]} : vector<16x96xf32> to vector<16x8xf32>
    %58 = vector.extract_strided_slice %44 {offsets = [0, 88], sizes = [16, 8], strides = [1, 1]} : vector<16x96xf32> to vector<16x8xf32>
    %59 = tpu.concatenate %55, %56, %57, %58 in 0 : vector<16x8xf32>, vector<16x8xf32>, vector<16x8xf32>, vector<16x8xf32> -> vector<64x8xf32>
    %60 = arith.truncf %49 : vector<64x8xf32> to vector<64x8xbf16>
    %61 = arith.truncf %54 : vector<64x8xf32> to vector<64x8xbf16>
    %cst_24 = arith.constant dense<0.000000e+00> : vector<64x64xf32>
    %62 = tpu.matmul %60, %61, %cst_24 {dimension_numbers = #tpu.dot_dimension_numbers<[1], [1], [0], [0], [0, 0, 1, 0], [], []>} : vector<64x8xbf16>, vector<64x8xbf16>, vector<64x64xf32> -> vector<64x64xf32>
    %cst_25 = arith.constant 0.353553385 : f32
    %63 = vector.broadcast %cst_25 : f32 to vector<64x64xf32>
    %64 = arith.mulf %62, %63 : vector<64x64xf32>
    %65 = arith.addf %64, %28 : vector<64x64xf32>
    %cst_26 = arith.constant dense<0xFF800000> : vector<64xf32>
    %66 = vector.multi_reduction <maximumf>, %65, %cst_26 [1] : vector<64x64xf32> to vector<64xf32>
    %67 = vector.shape_cast %66 : vector<64xf32> to vector<64x1xf32>
    %68 = vector.broadcast %67 : vector<64x1xf32> to vector<64x64xf32>
    %69 = arith.subf %65, %68 : vector<64x64xf32>
    %70 = math.exp %69 : vector<64x64xf32>
    %cst_27 = arith.constant dense<0.000000e+00> : vector<64xf32>
    %71 = vector.multi_reduction <add>, %70, %cst_27 [1] : vector<64x64xf32> to vector<64xf32>
    %72 = vector.shape_cast %71 : vector<64xf32> to vector<64x1xf32>
    %73 = tpu.reciprocal %72 {approx = true} : vector<64x1xf32> -> vector<64x1xf32>
    %74 = vector.broadcast %73 : vector<64x1xf32> to vector<64x64xf32>
    %75 = arith.mulf %70, %74 : vector<64x64xf32>
    %76 = arith.truncf %75 : vector<64x64xf32> to vector<64x64xbf16>
    %77 = arith.truncf %59 : vector<64x8xf32> to vector<64x8xbf16>
    %cst_28 = arith.constant dense<0.000000e+00> : vector<64x8xf32>
    %78 = tpu.matmul %76, %77, %cst_28 {dimension_numbers = #tpu.dot_dimension_numbers<[1], [0], [0], [1], [0, 0, 1, 1], [], []>} : vector<64x64xbf16>, vector<64x8xbf16>, vector<64x8xf32> -> vector<64x8xf32>
    %79 = vector.extract_strided_slice %78 {offsets = [0, 0], sizes = [16, 8], strides = [1, 1]} : vector<64x8xf32> to vector<16x8xf32>
    %80 = vector.extract_strided_slice %78 {offsets = [16, 0], sizes = [16, 8], strides = [1, 1]} : vector<64x8xf32> to vector<16x8xf32>
    %81 = vector.extract_strided_slice %78 {offsets = [32, 0], sizes = [16, 8], strides = [1, 1]} : vector<64x8xf32> to vector<16x8xf32>
    %82 = vector.extract_strided_slice %78 {offsets = [48, 0], sizes = [16, 8], strides = [1, 1]} : vector<64x8xf32> to vector<16x8xf32>
    %83 = tpu.concatenate %79, %80, %81, %82 in 1 : vector<16x8xf32>, vector<16x8xf32>, vector<16x8xf32>, vector<16x8xf32> -> vector<16x32xf32>
    %84 = arith.truncf %83 : vector<16x32xf32> to vector<16x32xbf16>
    %cst_29 = arith.constant dense<0.000000e+00> : vector<16x32xf32>
    %85 = tpu.matmul %84, %30, %cst_29 {dimension_numbers = #tpu.dot_dimension_numbers<[1], [0], [0], [1], [0, 0, 1, 1], [], []>} : vector<16x32xbf16>, vector<32x32xbf16>, vector<16x32xf32> -> vector<16x32xf32>
    %86 = vector.broadcast %34 : vector<1x32xf32> to vector<16x32xf32>
    %87 = arith.addf %85, %86 : vector<16x32xf32>
    %88 = arith.addf %13, %87 : vector<16x32xf32>
    %cst_30 = arith.constant dense<0.000000e+00> : vector<16xf32>
    %89 = vector.multi_reduction <add>, %88, %cst_30 [1] : vector<16x32xf32> to vector<16xf32>
    %90 = vector.shape_cast %89 : vector<16xf32> to vector<16x1xf32>
    %cst_31 = arith.constant 3.200000e+01 : f32
    %91 = vector.broadcast %cst_31 : f32 to vector<16x1xf32>
    %92 = arith.divf %90, %91 : vector<16x1xf32>
    %93 = vector.broadcast %92 : vector<16x1xf32> to vector<16x32xf32>
    %94 = arith.subf %88, %93 : vector<16x32xf32>
    %95 = arith.mulf %94, %94 : vector<16x32xf32>
    %cst_32 = arith.constant dense<0.000000e+00> : vector<16xf32>
    %96 = vector.multi_reduction <add>, %95, %cst_32 [1] : vector<16x32xf32> to vector<16xf32>
    %97 = vector.shape_cast %96 : vector<16xf32> to vector<16x1xf32>
    %cst_33 = arith.constant 3.200000e+01 : f32
    %98 = vector.broadcast %cst_33 : f32 to vector<16x1xf32>
    %99 = arith.divf %97, %98 : vector<16x1xf32>
    %100 = vector.broadcast %92 : vector<16x1xf32> to vector<16x32xf32>
    %101 = arith.subf %88, %100 : vector<16x32xf32>
    %cst_34 = arith.constant 9.99999974E-6 : f32
    %102 = vector.broadcast %cst_34 : f32 to vector<16x1xf32>
    %103 = arith.addf %99, %102 : vector<16x1xf32>
    %104 = math.rsqrt %103 : vector<16x1xf32>
    %105 = vector.broadcast %104 : vector<16x1xf32> to vector<16x32xf32>
    %106 = arith.mulf %101, %105 : vector<16x32xf32>
    %107 = vector.broadcast %35 : vector<1x32xf32> to vector<16x32xf32>
    %108 = arith.mulf %106, %107 : vector<16x32xf32>
    %109 = vector.broadcast %36 : vector<1x32xf32> to vector<16x32xf32>
    %110 = arith.addf %108, %109 : vector<16x32xf32>
    %111 = arith.truncf %110 : vector<16x32xf32> to vector<16x32xbf16>
    %cst_35 = arith.constant dense<0.000000e+00> : vector<16x64xf32>
    %112 = tpu.matmul %111, %31, %cst_35 {dimension_numbers = #tpu.dot_dimension_numbers<[1], [0], [0], [1], [0, 0, 1, 1], [], []>} : vector<16x32xbf16>, vector<32x64xbf16>, vector<16x64xf32> -> vector<16x64xf32>
    %113 = vector.broadcast %37 : vector<1x64xf32> to vector<16x64xf32>
    %114 = arith.addf %112, %113 : vector<16x64xf32>
    %cst_36 = arith.constant 0.000000e+00 : f32
    %115 = vector.broadcast %cst_36 : f32 to vector<16x64xf32>
    %116 = arith.maximumf %114, %115 : vector<16x64xf32>
    %117 = arith.truncf %116 : vector<16x64xf32> to vector<16x64xbf16>
    %cst_37 = arith.constant dense<0.000000e+00> : vector<16x32xf32>
    %118 = tpu.matmul %117, %32, %cst_37 {dimension_numbers = #tpu.dot_dimension_numbers<[1], [0], [0], [1], [0, 0, 1, 1], [], []>} : vector<16x64xbf16>, vector<64x32xbf16>, vector<16x32xf32> -> vector<16x32xf32>
    %119 = vector.broadcast %38 : vector<1x32xf32> to vector<16x32xf32>
    %120 = arith.addf %118, %119 : vector<16x32xf32>
    %121 = arith.addf %110, %120 : vector<16x32xf32>
    %cst_38 = arith.constant dense<0.000000e+00> : vector<16xf32>
    %122 = vector.multi_reduction <add>, %121, %cst_38 [1] : vector<16x32xf32> to vector<16xf32>
    %123 = vector.shape_cast %122 : vector<16xf32> to vector<16x1xf32>
    %cst_39 = arith.constant 3.200000e+01 : f32
    %124 = vector.broadcast %cst_39 : f32 to vector<16x1xf32>
    %125 = arith.divf %123, %124 : vector<16x1xf32>
    %126 = vector.broadcast %125 : vector<16x1xf32> to vector<16x32xf32>
    %127 = arith.subf %121, %126 : vector<16x32xf32>
    %128 = arith.mulf %127, %127 : vector<16x32xf32>
    %cst_40 = arith.constant dense<0.000000e+00> : vector<16xf32>
    %129 = vector.multi_reduction <add>, %128, %cst_40 [1] : vector<16x32xf32> to vector<16xf32>
    %130 = vector.shape_cast %129 : vector<16xf32> to vector<16x1xf32>
    %cst_41 = arith.constant 3.200000e+01 : f32
    %131 = vector.broadcast %cst_41 : f32 to vector<16x1xf32>
    %132 = arith.divf %130, %131 : vector<16x1xf32>
    %133 = vector.broadcast %125 : vector<16x1xf32> to vector<16x32xf32>
    %134 = arith.subf %121, %133 : vector<16x32xf32>
    %cst_42 = arith.constant 9.99999974E-6 : f32
    %135 = vector.broadcast %cst_42 : f32 to vector<16x1xf32>
    %136 = arith.addf %132, %135 : vector<16x1xf32>
    %137 = math.rsqrt %136 : vector<16x1xf32>
    %138 = vector.broadcast %137 : vector<16x1xf32> to vector<16x32xf32>
    %139 = arith.mulf %134, %138 : vector<16x32xf32>
    %140 = vector.broadcast %39 : vector<1x32xf32> to vector<16x32xf32>
    %141 = arith.mulf %139, %140 : vector<16x32xf32>
    %142 = vector.broadcast %40 : vector<1x32xf32> to vector<16x32xf32>
    %143 = arith.addf %141, %142 : vector<16x32xf32>
    %c224 = arith.constant 224 : index
    %c0_43 = arith.constant 0 : index
    %144 = vector.load %arg1[%c224, %c0_43] : memref<384x96xbf16, #tpu.memory_space<vmem>>, vector<32x96xbf16>
    %c256 = arith.constant 256 : index
    %c0_44 = arith.constant 0 : index
    %145 = vector.load %arg1[%c256, %c0_44] : memref<384x96xbf16, #tpu.memory_space<vmem>>, vector<32x32xbf16>
    %c288 = arith.constant 288 : index
    %c0_45 = arith.constant 0 : index
    %146 = vector.load %arg1[%c288, %c0_45] : memref<384x96xbf16, #tpu.memory_space<vmem>>, vector<32x64xbf16>
    %c320 = arith.constant 320 : index
    %c0_46 = arith.constant 0 : index
    %147 = vector.load %arg1[%c320, %c0_46] : memref<384x96xbf16, #tpu.memory_space<vmem>>, vector<64x32xbf16>
    %c24 = arith.constant 24 : index
    %c0_47 = arith.constant 0 : index
    %148 = vector.load %arg2[%c24, %c0_47] : memref<40x96xf32, #tpu.memory_space<vmem>>, vector<1x96xf32>
    %c25 = arith.constant 25 : index
    %c0_48 = arith.constant 0 : index
    %149 = vector.load %arg2[%c25, %c0_48] : memref<40x96xf32, #tpu.memory_space<vmem>>, vector<1x32xf32>
    %c26 = arith.constant 26 : index
    %c0_49 = arith.constant 0 : index
    %150 = vector.load %arg2[%c26, %c0_49] : memref<40x96xf32, #tpu.memory_space<vmem>>, vector<1x32xf32>
    %c27 = arith.constant 27 : index
    %c0_50 = arith.constant 0 : index
    %151 = vector.load %arg2[%c27, %c0_50] : memref<40x96xf32, #tpu.memory_space<vmem>>, vector<1x32xf32>
    %c28 = arith.constant 28 : index
    %c0_51 = arith.constant 0 : index
    %152 = vector.load %arg2[%c28, %c0_51] : memref<40x96xf32, #tpu.memory_space<vmem>>, vector<1x64xf32>
    %c29 = arith.constant 29 : index
    %c0_52 = arith.constant 0 : index
    %153 = vector.load %arg2[%c29, %c0_52] : memref<40x96xf32, #tpu.memory_space<vmem>>, vector<1x32xf32>
    %c30 = arith.constant 30 : index
    %c0_53 = arith.constant 0 : index
    %154 = vector.load %arg2[%c30, %c0_53] : memref<40x96xf32, #tpu.memory_space<vmem>>, vector<1x32xf32>
    %c31 = arith.constant 31 : index
    %c0_54 = arith.constant 0 : index
    %155 = vector.load %arg2[%c31, %c0_54] : memref<40x96xf32, #tpu.memory_space<vmem>>, vector<1x32xf32>
    %156 = arith.truncf %143 : vector<16x32xf32> to vector<16x32xbf16>
    %cst_55 = arith.constant dense<0.000000e+00> : vector<16x96xf32>
    %157 = tpu.matmul %156, %144, %cst_55 {dimension_numbers = #tpu.dot_dimension_numbers<[1], [0], [0], [1], [0, 0, 1, 1], [], []>} : vector<16x32xbf16>, vector<32x96xbf16>, vector<16x96xf32> -> vector<16x96xf32>
    %158 = vector.broadcast %148 : vector<1x96xf32> to vector<16x96xf32>
    %159 = arith.addf %157, %158 : vector<16x96xf32>
    %160 = vector.extract_strided_slice %159 {offsets = [0, 0], sizes = [16, 8], strides = [1, 1]} : vector<16x96xf32> to vector<16x8xf32>
    %161 = vector.extract_strided_slice %159 {offsets = [0, 8], sizes = [16, 8], strides = [1, 1]} : vector<16x96xf32> to vector<16x8xf32>
    %162 = vector.extract_strided_slice %159 {offsets = [0, 16], sizes = [16, 8], strides = [1, 1]} : vector<16x96xf32> to vector<16x8xf32>
    %163 = vector.extract_strided_slice %159 {offsets = [0, 24], sizes = [16, 8], strides = [1, 1]} : vector<16x96xf32> to vector<16x8xf32>
    %164 = tpu.concatenate %160, %161, %162, %163 in 0 : vector<16x8xf32>, vector<16x8xf32>, vector<16x8xf32>, vector<16x8xf32> -> vector<64x8xf32>
    %165 = vector.extract_strided_slice %159 {offsets = [0, 32], sizes = [16, 8], strides = [1, 1]} : vector<16x96xf32> to vector<16x8xf32>
    %166 = vector.extract_strided_slice %159 {offsets = [0, 40], sizes = [16, 8], strides = [1, 1]} : vector<16x96xf32> to vector<16x8xf32>
    %167 = vector.extract_strided_slice %159 {offsets = [0, 48], sizes = [16, 8], strides = [1, 1]} : vector<16x96xf32> to vector<16x8xf32>
    %168 = vector.extract_strided_slice %159 {offsets = [0, 56], sizes = [16, 8], strides = [1, 1]} : vector<16x96xf32> to vector<16x8xf32>
    %169 = tpu.concatenate %165, %166, %167, %168 in 0 : vector<16x8xf32>, vector<16x8xf32>, vector<16x8xf32>, vector<16x8xf32> -> vector<64x8xf32>
    %170 = vector.extract_strided_slice %159 {offsets = [0, 64], sizes = [16, 8], strides = [1, 1]} : vector<16x96xf32> to vector<16x8xf32>
    %171 = vector.extract_strided_slice %159 {offsets = [0, 72], sizes = [16, 8], strides = [1, 1]} : vector<16x96xf32> to vector<16x8xf32>
    %172 = vector.extract_strided_slice %159 {offsets = [0, 80], sizes = [16, 8], strides = [1, 1]} : vector<16x96xf32> to vector<16x8xf32>
    %173 = vector.extract_strided_slice %159 {offsets = [0, 88], sizes = [16, 8], strides = [1, 1]} : vector<16x96xf32> to vector<16x8xf32>
    %174 = tpu.concatenate %170, %171, %172, %173 in 0 : vector<16x8xf32>, vector<16x8xf32>, vector<16x8xf32>, vector<16x8xf32> -> vector<64x8xf32>
    %175 = arith.truncf %164 : vector<64x8xf32> to vector<64x8xbf16>
    %176 = arith.truncf %169 : vector<64x8xf32> to vector<64x8xbf16>
    %cst_56 = arith.constant dense<0.000000e+00> : vector<64x64xf32>
    %177 = tpu.matmul %175, %176, %cst_56 {dimension_numbers = #tpu.dot_dimension_numbers<[1], [1], [0], [0], [0, 0, 1, 0], [], []>} : vector<64x8xbf16>, vector<64x8xbf16>, vector<64x64xf32> -> vector<64x64xf32>
    %cst_57 = arith.constant 0.353553385 : f32
    %178 = vector.broadcast %cst_57 : f32 to vector<64x64xf32>
    %179 = arith.mulf %177, %178 : vector<64x64xf32>
    %180 = arith.addf %179, %28 : vector<64x64xf32>
    %cst_58 = arith.constant dense<0xFF800000> : vector<64xf32>
    %181 = vector.multi_reduction <maximumf>, %180, %cst_58 [1] : vector<64x64xf32> to vector<64xf32>
    %182 = vector.shape_cast %181 : vector<64xf32> to vector<64x1xf32>
    %183 = vector.broadcast %182 : vector<64x1xf32> to vector<64x64xf32>
    %184 = arith.subf %180, %183 : vector<64x64xf32>
    %185 = math.exp %184 : vector<64x64xf32>
    %cst_59 = arith.constant dense<0.000000e+00> : vector<64xf32>
    %186 = vector.multi_reduction <add>, %185, %cst_59 [1] : vector<64x64xf32> to vector<64xf32>
    %187 = vector.shape_cast %186 : vector<64xf32> to vector<64x1xf32>
    %188 = tpu.reciprocal %187 {approx = true} : vector<64x1xf32> -> vector<64x1xf32>
    %189 = vector.broadcast %188 : vector<64x1xf32> to vector<64x64xf32>
    %190 = arith.mulf %185, %189 : vector<64x64xf32>
    %191 = arith.truncf %190 : vector<64x64xf32> to vector<64x64xbf16>
    %192 = arith.truncf %174 : vector<64x8xf32> to vector<64x8xbf16>
    %cst_60 = arith.constant dense<0.000000e+00> : vector<64x8xf32>
    %193 = tpu.matmul %191, %192, %cst_60 {dimension_numbers = #tpu.dot_dimension_numbers<[1], [0], [0], [1], [0, 0, 1, 1], [], []>} : vector<64x64xbf16>, vector<64x8xbf16>, vector<64x8xf32> -> vector<64x8xf32>
    %194 = vector.extract_strided_slice %193 {offsets = [0, 0], sizes = [16, 8], strides = [1, 1]} : vector<64x8xf32> to vector<16x8xf32>
    %195 = vector.extract_strided_slice %193 {offsets = [16, 0], sizes = [16, 8], strides = [1, 1]} : vector<64x8xf32> to vector<16x8xf32>
    %196 = vector.extract_strided_slice %193 {offsets = [32, 0], sizes = [16, 8], strides = [1, 1]} : vector<64x8xf32> to vector<16x8xf32>
    %197 = vector.extract_strided_slice %193 {offsets = [48, 0], sizes = [16, 8], strides = [1, 1]} : vector<64x8xf32> to vector<16x8xf32>
    %198 = tpu.concatenate %194, %195, %196, %197 in 1 : vector<16x8xf32>, vector<16x8xf32>, vector<16x8xf32>, vector<16x8xf32> -> vector<16x32xf32>
    %199 = arith.truncf %198 : vector<16x32xf32> to vector<16x32xbf16>
    %cst_61 = arith.constant dense<0.000000e+00> : vector<16x32xf32>
    %200 = tpu.matmul %199, %145, %cst_61 {dimension_numbers = #tpu.dot_dimension_numbers<[1], [0], [0], [1], [0, 0, 1, 1], [], []>} : vector<16x32xbf16>, vector<32x32xbf16>, vector<16x32xf32> -> vector<16x32xf32>
    %201 = vector.broadcast %149 : vector<1x32xf32> to vector<16x32xf32>
    %202 = arith.addf %200, %201 : vector<16x32xf32>
    %203 = arith.addf %143, %202 : vector<16x32xf32>
    %cst_62 = arith.constant dense<0.000000e+00> : vector<16xf32>
    %204 = vector.multi_reduction <add>, %203, %cst_62 [1] : vector<16x32xf32> to vector<16xf32>
    %205 = vector.shape_cast %204 : vector<16xf32> to vector<16x1xf32>
    %cst_63 = arith.constant 3.200000e+01 : f32
    %206 = vector.broadcast %cst_63 : f32 to vector<16x1xf32>
    %207 = arith.divf %205, %206 : vector<16x1xf32>
    %208 = vector.broadcast %207 : vector<16x1xf32> to vector<16x32xf32>
    %209 = arith.subf %203, %208 : vector<16x32xf32>
    %210 = arith.mulf %209, %209 : vector<16x32xf32>
    %cst_64 = arith.constant dense<0.000000e+00> : vector<16xf32>
    %211 = vector.multi_reduction <add>, %210, %cst_64 [1] : vector<16x32xf32> to vector<16xf32>
    %212 = vector.shape_cast %211 : vector<16xf32> to vector<16x1xf32>
    %cst_65 = arith.constant 3.200000e+01 : f32
    %213 = vector.broadcast %cst_65 : f32 to vector<16x1xf32>
    %214 = arith.divf %212, %213 : vector<16x1xf32>
    %215 = vector.broadcast %207 : vector<16x1xf32> to vector<16x32xf32>
    %216 = arith.subf %203, %215 : vector<16x32xf32>
    %cst_66 = arith.constant 9.99999974E-6 : f32
    %217 = vector.broadcast %cst_66 : f32 to vector<16x1xf32>
    %218 = arith.addf %214, %217 : vector<16x1xf32>
    %219 = math.rsqrt %218 : vector<16x1xf32>
    %220 = vector.broadcast %219 : vector<16x1xf32> to vector<16x32xf32>
    %221 = arith.mulf %216, %220 : vector<16x32xf32>
    %222 = vector.broadcast %150 : vector<1x32xf32> to vector<16x32xf32>
    %223 = arith.mulf %221, %222 : vector<16x32xf32>
    %224 = vector.broadcast %151 : vector<1x32xf32> to vector<16x32xf32>
    %225 = arith.addf %223, %224 : vector<16x32xf32>
    %226 = arith.truncf %225 : vector<16x32xf32> to vector<16x32xbf16>
    %cst_67 = arith.constant dense<0.000000e+00> : vector<16x64xf32>
    %227 = tpu.matmul %226, %146, %cst_67 {dimension_numbers = #tpu.dot_dimension_numbers<[1], [0], [0], [1], [0, 0, 1, 1], [], []>} : vector<16x32xbf16>, vector<32x64xbf16>, vector<16x64xf32> -> vector<16x64xf32>
    %228 = vector.broadcast %152 : vector<1x64xf32> to vector<16x64xf32>
    %229 = arith.addf %227, %228 : vector<16x64xf32>
    %cst_68 = arith.constant 0.000000e+00 : f32
    %230 = vector.broadcast %cst_68 : f32 to vector<16x64xf32>
    %231 = arith.maximumf %229, %230 : vector<16x64xf32>
    %232 = arith.truncf %231 : vector<16x64xf32> to vector<16x64xbf16>
    %cst_69 = arith.constant dense<0.000000e+00> : vector<16x32xf32>
    %233 = tpu.matmul %232, %147, %cst_69 {dimension_numbers = #tpu.dot_dimension_numbers<[1], [0], [0], [1], [0, 0, 1, 1], [], []>} : vector<16x64xbf16>, vector<64x32xbf16>, vector<16x32xf32> -> vector<16x32xf32>
    %234 = vector.broadcast %153 : vector<1x32xf32> to vector<16x32xf32>
    %235 = arith.addf %233, %234 : vector<16x32xf32>
    %236 = arith.addf %225, %235 : vector<16x32xf32>
    %cst_70 = arith.constant dense<0.000000e+00> : vector<16xf32>
    %237 = vector.multi_reduction <add>, %236, %cst_70 [1] : vector<16x32xf32> to vector<16xf32>
    %238 = vector.shape_cast %237 : vector<16xf32> to vector<16x1xf32>
    %cst_71 = arith.constant 3.200000e+01 : f32
    %239 = vector.broadcast %cst_71 : f32 to vector<16x1xf32>
    %240 = arith.divf %238, %239 : vector<16x1xf32>
    %241 = vector.broadcast %240 : vector<16x1xf32> to vector<16x32xf32>
    %242 = arith.subf %236, %241 : vector<16x32xf32>
    %243 = arith.mulf %242, %242 : vector<16x32xf32>
    %cst_72 = arith.constant dense<0.000000e+00> : vector<16xf32>
    %244 = vector.multi_reduction <add>, %243, %cst_72 [1] : vector<16x32xf32> to vector<16xf32>
    %245 = vector.shape_cast %244 : vector<16xf32> to vector<16x1xf32>
    %cst_73 = arith.constant 3.200000e+01 : f32
    %246 = vector.broadcast %cst_73 : f32 to vector<16x1xf32>
    %247 = arith.divf %245, %246 : vector<16x1xf32>
    %248 = vector.broadcast %240 : vector<16x1xf32> to vector<16x32xf32>
    %249 = arith.subf %236, %248 : vector<16x32xf32>
    %cst_74 = arith.constant 9.99999974E-6 : f32
    %250 = vector.broadcast %cst_74 : f32 to vector<16x1xf32>
    %251 = arith.addf %247, %250 : vector<16x1xf32>
    %252 = math.rsqrt %251 : vector<16x1xf32>
    %253 = vector.broadcast %252 : vector<16x1xf32> to vector<16x32xf32>
    %254 = arith.mulf %249, %253 : vector<16x32xf32>
    %255 = vector.broadcast %154 : vector<1x32xf32> to vector<16x32xf32>
    %256 = arith.mulf %254, %255 : vector<16x32xf32>
    %257 = vector.broadcast %155 : vector<1x32xf32> to vector<16x32xf32>
    %258 = arith.addf %256, %257 : vector<16x32xf32>
    %c32 = arith.constant 32 : index
    %c0_75 = arith.constant 0 : index
    %259 = vector.load %arg2[%c32, %c0_75] : memref<40x96xf32, #tpu.memory_space<vmem>>, vector<1x32xf32>
    %c33 = arith.constant 33 : index
    %c0_76 = arith.constant 0 : index
    %260 = vector.load %arg2[%c33, %c0_76] : memref<40x96xf32, #tpu.memory_space<vmem>>, vector<1x1xf32>
    %261 = vector.broadcast %259 : vector<1x32xf32> to vector<16x32xf32>
    %262 = arith.mulf %258, %261 : vector<16x32xf32>
    %cst_77 = arith.constant dense<0.000000e+00> : vector<16xf32>
    %263 = vector.multi_reduction <add>, %262, %cst_77 [1] : vector<16x32xf32> to vector<16xf32>
    %264 = vector.shape_cast %263 : vector<16xf32> to vector<16x1xf32>
    %265 = vector.broadcast %260 : vector<1x1xf32> to vector<16x1xf32>
    %266 = arith.addf %264, %265 : vector<16x1xf32>
    %267 = tpu.iota {dimensions = array<i32: 0>} : vector<16x1xi32>
    %c7_i32 = arith.constant 7 : i32
    %268 = vector.broadcast %c7_i32 : i32 to vector<16x1xi32>
    %269 = arith.andi %267, %268 : vector<16x1xi32>
    %c0_i32 = arith.constant 0 : i32
    %270 = vector.broadcast %c0_i32 : i32 to vector<16x1xi32>
    %271 = arith.cmpi eq, %269, %270 : vector<16x1xi32>
    %272 = arith.extui %271 : vector<16x1xi1> to vector<16x1xi32>
    %273 = arith.sitofp %272 : vector<16x1xi32> to vector<16x1xf32>
    %cst_78 = arith.constant 0.000000e+00 : f32
    %274 = vector.broadcast %cst_78 : f32 to vector<16x1xf32>
    %275 = arith.maximumf %266, %274 : vector<16x1xf32>
    %276 = arith.mulf %266, %1 : vector<16x1xf32>
    %277 = arith.subf %275, %276 : vector<16x1xf32>
    %278 = math.absf %266 : vector<16x1xf32>
    %cst_79 = arith.constant 0.000000e+00 : f32
    %279 = vector.broadcast %cst_79 : f32 to vector<16x1xf32>
    %280 = arith.subf %279, %278 : vector<16x1xf32>
    %281 = math.exp %280 : vector<16x1xf32>
    %cst_80 = arith.constant 1.000000e+00 : f32
    %282 = vector.broadcast %cst_80 : f32 to vector<16x1xf32>
    %283 = arith.addf %282, %281 : vector<16x1xf32>
    %284 = math.log %283 : vector<16x1xf32>
    %285 = arith.addf %277, %284 : vector<16x1xf32>
    %286 = arith.mulf %285, %273 : vector<16x1xf32>
    %287 = vector.shape_cast %286 : vector<16x1xf32> to vector<1x16x1xf32>
    %cst_81 = arith.constant dense<0.000000e+00> : vector<1xf32>
    %288 = vector.multi_reduction <add>, %287, %cst_81 [1, 2] : vector<1x16x1xf32> to vector<1xf32>
    %289 = vector.shape_cast %288 : vector<1xf32> to vector<1x1x1xf32>
    %290 = vector.extract %289[0, 0, 0] : f32 from vector<1x1x1xf32>
    %291 = vector.broadcast %290 : f32 to vector<1x1xf32>
    %cst_82 = arith.constant 5.000000e-01 : f32
    %292 = vector.broadcast %cst_82 : f32 to vector<1x1xf32>
    %293 = arith.mulf %291, %292 : vector<1x1xf32>
    %294 = tpu.concatenate %266, %293 in 0 : vector<16x1xf32>, vector<1x1xf32> -> vector<17x1xf32>
    %c0_83 = arith.constant 0 : index
    %c0_84 = arith.constant 0 : index
    %295 = vector.load %arg3[%c0_83, %c0_84] : memref<17x1xf32, #tpu.memory_space<vmem>>, vector<17x1xf32>
    tpu.vector_store %arg3[%c0_83, %c0_84], %294 {strides = array<i32>} : memref<17x1xf32, #tpu.memory_space<vmem>>, vector<17x1xf32>,
    return
  }
}

</mosaic_0001>

<llo_original>
// kernel: discriminator_forward.1
$region0: #{discriminator_forward.1}
  #allocation0 [shape = 'u32[]', space=smem, size = 0x4, offset = 0x4, fixed_abs, tag = 'smem constant byte address 0x4 - core index']
  #allocation1 [shape = 'u32[144,128]{1,0:T(1,128)}', space=vmem, size = 0x12000, scoped, tag = 'internal scratch']
  %s0 = inlined_call_operand.vmem [shape: f32[24,16], index: 0, kind: input, shape index: {}]
  %s1 = inlined_call_operand.vmem [shape: bf16[384,96], index: 1, kind: input, shape index: {}]
  %s2 = inlined_call_operand.vmem [shape: f32[40,96], index: 2, kind: input, shape index: {}]
  %s3 = inlined_call_operand.vmem [shape: f32[17,1], index: 3, kind: output, shape index: {}]
  %s4 = sld [smem:[#allocation0]]
  $region22: #{discriminator_forward.1} parent=0
    _
  %s6 = ssub.s32 1, %s4
  %s7 = scalar_select 0, %s6, %s4
  // Predicated region
  $region2: #{discriminator_forward.1} parent=0 // pred_check
    _
  $region3: #{discriminator_forward.1} parent=0 // pred_check_branch
    %9 = sbr.rel (0) target = $region5
  $region4: #{discriminator_forward.1} parent=0 // pred_region
    _
  $region5: #{discriminator_forward.1} parent=0 // pred_fallthru
    _
  // Predicated region
  $region6: #{discriminator_forward.1} parent=0 // pred_check
    _
  $region7: #{discriminator_forward.1} parent=0 // pred_check_branch
    %11 = sbr.rel (0) target = $region9
  $region8: #{discriminator_forward.1} parent=0 // pred_region
    _
  $region9: #{discriminator_forward.1} parent=0 // pred_fallthru
    _
  // Predicated region
  $region10: #{discriminator_forward.1} parent=0 // pred_check
    _
  $region11: #{discriminator_forward.1} parent=0 // pred_check_branch
    %13 = sbr.rel (0) target = $region13
  $region12: #{discriminator_forward.1} parent=0 // pred_region
    _
  $region13: #{discriminator_forward.1} parent=0 // pred_fallthru
    _
  %v15 = vld [vmem:[%s0] sm:$0x1]
  %v16 = vld [vmem:[%s0 + $0x8] sm:$0xff]
  %v17 = vld [vmem:[%s0 + $0x10] sm:$0xff]
  %v18 = vcvt.f32.s32.to.zero.pseudo %v16
  %v19 = vcvt.f32.s32.to.zero.pseudo %v17
  %v20 = vlaneseq
  %v21 = vand.u32 %v20, 127
  %22 = vset.pattern.permute.xlu0 1
  %23 = vperm.xlu0 %22, %v18
  %v24 = vpop.permute.xlu0 %23
  %25 = vset.pattern.permute.xlu0 1
  %26 = vperm.xlu0 %25, %v19
  %v27 = vpop.permute.xlu0 %26
  %vm28 = vcmp.eq.s32.totalorder %v24, %v21
  %vm29 = vcmp.eq.s32.totalorder %v27, %v21
  %v30 = vsel %vm28, 1, 0
  %v31 = vsel %vm29, 1, 0
  %v32 = vcvt.s32.f32 %v30
  %v33 = vcvt.s32.f32 %v31
  %v34 = vpack.c.bf16 %v33, %v32
  %v35 = vld [vmem:[%s1] sm:$0xf]
  %v36 = vld [vmem:[%s1 + $0x4] sm:$0xf]
  %v37 = vld [vmem:[%s1 + $0x8] sm:$0xf]
  %v38 = vld [vmem:[%s1 + $0xc] sm:$0xf]
  %v39 = vld [vmem:[%s1 + $0x10] sm:$0xf]
  %v40 = vld [vmem:[%s1 + $0x14] sm:$0xf]
  %v41 = vld [vmem:[%s1 + $0x18] sm:$0xf]
  %v42 = vld [vmem:[%s1 + $0x1c] sm:$0xf]
  %v43 = vld [vmem:[%s2] sm:$0xff]
  %v44 = vld [vmem:[%s2 + $0x8] sm:$0xff]
  %v53 = vunpack.c.l.b16 %v35
  %v54 = vunpack.c.l.b16 %v36
  %v55 = vunpack.c.l.b16 %v37
  %v56 = vunpack.c.l.b16 %v38
  %v57 = vunpack.c.l.b16 %v39
  %v58 = vunpack.c.l.b16 %v40
  %v59 = vunpack.c.l.b16 %v41
  %v60 = vunpack.c.l.b16 %v42
  %v61 = vpack.c.b16 %v54, %v53
  %v62 = vpack.c.b16 %v56, %v55
  %v63 = vpack.c.b16 %v58, %v57
  %v64 = vpack.c.b16 %v60, %v59
  %vm69 = vcmask 523264
  %v71 = vsel %vm69, %v34, 0
  %73 = vmatprep.subr.bf16.mxu0 0
  %74 = vmatpush1.bf16.msra.mxu0 %v61
  %75 = vmatprep.subr.bf16.mxu0 0
  %76 = vmatpush1.bf16.msra.mxu0 %v62
  %77 = vmatprep.subr.bf16.mxu0 0
  %78 = vmatpush1.bf16.msra.mxu0 %v63
  %79 = vmatprep.subr.bf16.mxu0 0
  %80 = vmatpush1.bf16.msra.mxu0 %v64
  %81 = vmatprep.subr.bf16.mxu0 0
  %82 = vmatpush1.bf16.msra.mxu0 0
  %83 = vmatprep.subr.bf16.mxu0 0
  %84 = vmatpush1.bf16.msra.mxu0 0
  %85 = vmatprep.subr.bf16.mxu0 0
  %86 = vmatpush1.bf16.msra.mxu0 0
  %87 = vmatprep.subr.bf16.mxu0 0
  %88 = vmatpush1.bf16.msra.mxu0 0
  %89 = vmatprep.subr.bf16.mxu0 0
  %90 = vmatpush1.bf16.msra.mxu0 0
  %91 = vmatprep.subr.bf16.mxu0 0
  %92 = vmatpush1.bf16.msra.mxu0 0
  %93 = vmatprep.subr.bf16.mxu0 0
  %94 = vmatpush1.bf16.msra.mxu0 0
  %95 = vmatprep.subr.bf16.mxu0 0
  %96 = vmatpush1.bf16.msra.mxu0 0
  %97 = vmatprep.subr.bf16.mxu0 0
  %98 = vmatpush1.bf16.msra.mxu0 0
  %99 = vmatprep.subr.bf16.mxu0 0
  %100 = vmatpush1.bf16.msra.mxu0 0
  %101 = vmatprep.subr.bf16.mxu0 0
  %102 = vmatpush1.bf16.msra.mxu0 0
  %103 = vmatprep.subr.bf16.mxu0 0
  %104 = vmatpush1.bf16.msra.mxu0 0
  %105 = vmatprep.mubr.bf16.mxu0 0
  %106 = vmatmul.mubr.bf16.gmra.mrb[0].mxu0 %v71
  %v107 = vpop.f32.mrb[0].mxu0
  %v108 = vadd.f32 %v43, %v107
  %v109 = vpop.f32.mrb[0].mxu0
  %v110 = vpop.f32.mrb[0].mxu0
  %v111 = vadd.f32 %v44, %v110
  %v112 = vpop.f32.mrb[0].mxu0
  %113 = vdwg.mxu0
  %115 = vrot.lane.b32.xlu0 %v15, 16
  %v116 = vpop.permute.xlu0 %115
  %118 = vrot.lane.b32.xlu0 %v15, 32
  %v119 = vpop.permute.xlu0 %118
  %121 = vrot.lane.b32.xlu0 %v15, 48
  %v122 = vpop.permute.xlu0 %121
  %vm124 = vcmask 130048
  %v125 = vsel %vm124, %v15, %v116
  %vm126 = vcmask 261120
  %v127 = vsel %vm126, %v125, %v119
  %vm128 = vcmask 392192
  %v129 = vsel %vm128, %v127, %v122
  %vm130 = vcmp.ne.f32.partialorder %v129, 0.0
  %v131 = vlaneseq
  %v132 = vshrl.u32 %v131, 7
  %v133 = vadd.s32 %v132, 8
  %v134 = vadd.s32 %v132, 16
  %v135 = vadd.s32 %v132, 24
  %v136 = vadd.s32 %v132, 32
  %v137 = vadd.s32 %v132, 40
  %v138 = vadd.s32 %v132, 48
  %v139 = vadd.s32 %v132, 56
  %v140 = vshra.s32 %v132, 3
  %v141 = vshra.s32 %v133, 3
  %v142 = vshra.s32 %v134, 3
  %v143 = vshra.s32 %v135, 3
  %v144 = vshra.s32 %v136, 3
  %v145 = vshra.s32 %v137, 3
  %v146 = vshra.s32 %v138, 3
  %v147 = vshra.s32 %v139, 3
  %v148 = vshra.s32 %v21, 3
  %vm149 = vcmp.eq.s32.totalorder %v140, %v148
  %vm150 = vcmp.eq.s32.totalorder %v141, %v148
  %vm151 = vcmp.eq.s32.totalorder %v142, %v148
  %vm152 = vcmp.eq.s32.totalorder %v143, %v148
  %vm153 = vcmp.eq.s32.totalorder %v144, %v148
  %vm154 = vcmp.eq.s32.totalorder %v145, %v148
  %vm155 = vcmp.eq.s32.totalorder %v146, %v148
  %vm156 = vcmp.eq.s32.totalorder %v147, %v148
  %v157 = vsel %vm130, 1, 0
  %v158 = vlaneseq
  %v159 = vshrl.u32 %v158, 7
  %v160 = vsub.s32 0, %v159
  %v161 = vrot.slane %v157, %v160
  %vm162 = vcmp.eq.s32.totalorder %v161, 1
  %vm163 = vmand %vm149, %vm162
  %vm164 = vmand %vm150, %vm162
  %vm165 = vmand %vm151, %vm162
  %vm166 = vmand %vm152, %vm162
  %vm167 = vmand %vm153, %vm162
  %vm168 = vmand %vm154, %vm162
  %vm169 = vmand %vm155, %vm162
  %vm170 = vmand %vm156, %vm162
  %v171 = vsel %vm163, 0.0, -1e+09
  %v172 = vsel %vm164, 0.0, -1e+09
  %v173 = vsel %vm165, 0.0, -1e+09
  %v174 = vsel %vm166, 0.0, -1e+09
  %v175 = vsel %vm167, 0.0, -1e+09
  %v176 = vsel %vm168, 0.0, -1e+09
  %v177 = vsel %vm169, 0.0, -1e+09
  %v178 = vsel %vm170, 0.0, -1e+09
  %v179 = vld [vmem:[%s1 + $0x20] sm:$0xf]
  %v180 = vld [vmem:[%s1 + $0x24] sm:$0xf]
  %v181 = vld [vmem:[%s1 + $0x28] sm:$0xf]
  %v182 = vld [vmem:[%s1 + $0x2c] sm:$0xf]
  %v183 = vld [vmem:[%s1 + $0x30] sm:$0xf]
  %v184 = vld [vmem:[%s1 + $0x34] sm:$0xf]
  %v185 = vld [vmem:[%s1 + $0x38] sm:$0xf]
  %v186 = vld [vmem:[%s1 + $0x3c] sm:$0xf]
  %v187 = vld [vmem:[%s1 + $0x40] sm:$0xf]
  %v188 = vld [vmem:[%s1 + $0x44] sm:$0xf]
  %v189 = vld [vmem:[%s1 + $0x48] sm:$0xf]
  %v190 = vld [vmem:[%s1 + $0x4c] sm:$0xf]
  %v191 = vld [vmem:[%s1 + $0x50] sm:$0xf]
  %v192 = vld [vmem:[%s1 + $0x54] sm:$0xf]
  %v193 = vld [vmem:[%s1 + $0x58] sm:$0xf]
  %v194 = vld [vmem:[%s1 + $0x5c] sm:$0xf]
  %v195 = vld [vmem:[%s1 + $0x60] sm:$0xf]
  %v196 = vld [vmem:[%s1 + $0x64] sm:$0xf]
  %v197 = vld [vmem:[%s1 + $0x68] sm:$0xf]
  %v198 = vld [vmem:[%s1 + $0x6c] sm:$0xf]
  %v199 = vld [vmem:[%s2 + $0x10] sm:$0x1]
  %v200 = vld [vmem:[%s2 + $0x11] sm:$0x1]
  %v201 = vld [vmem:[%s2 + $0x12] sm:$0x1]
  %v202 = vld [vmem:[%s2 + $0x13] sm:$0x1]
  %v203 = vld [vmem:[%s2 + $0x14] sm:$0x1]
  %v204 = vld [vmem:[%s2 + $0x15] sm:$0x1]
  %v205 = vld [vmem:[%s2 + $0x16] sm:$0x1]
  %v206 = vld [vmem:[%s2 + $0x17] sm:$0x1]
  %v207 = vpack.c.bf16 %v111, %v108
  %v208 = vlaneseq
  %v209 = vshrl.u32 %v208, 7
  %v210 = vsub.s32 0, %v209
  %v211 = vrot.slane %v199, %v210
  %v216 = vunpack.c.l.b16 %v179
  %v217 = vunpack.c.l.b16 %v180
  %v218 = vunpack.c.l.b16 %v181
  %v219 = vunpack.c.l.b16 %v182
  %v220 = vpack.c.b16 %v217, %v216
  %v221 = vpack.c.b16 %v219, %v218
  %v225 = vsel %vm126, %v207, 0
  %227 = vmatprep.subr.bf16.mxu0 0
  %228 = vmatpush1.bf16.msra.mxu0 %v220
  %229 = vmatprep.subr.bf16.mxu0 0
  %230 = vmatpush1.bf16.msra.mxu0 %v221
  %231 = vmatprep.subr.bf16.mxu0 0
  %232 = vmatpush1.bf16.msra.mxu0 0
  %233 = vmatprep.subr.bf16.mxu0 0
  %234 = vmatpush1.bf16.msra.mxu0 0
  %235 = vmatprep.subr.bf16.mxu0 0
  %236 = vmatpush1.bf16.msra.mxu0 0
  %237 = vmatprep.subr.bf16.mxu0 0
  %238 = vmatpush1.bf16.msra.mxu0 0
  %239 = vmatprep.subr.bf16.mxu0 0
  %240 = vmatpush1.bf16.msra.mxu0 0
  %241 = vmatprep.subr.bf16.mxu0 0
  %242 = vmatpush1.bf16.msra.mxu0 0
  %243 = vmatprep.subr.bf16.mxu0 0
  %244 = vmatpush1.bf16.msra.mxu0 0
  %245 = vmatprep.subr.bf16.mxu0 0
  %246 = vmatpush1.bf16.msra.mxu0 0
  %247 = vmatprep.subr.bf16.mxu0 0
  %248 = vmatpush1.bf16.msra.mxu0 0
  %249 = vmatprep.subr.bf16.mxu0 0
  %250 = vmatpush1.bf16.msra.mxu0 0
  %251 = vmatprep.subr.bf16.mxu0 0
  %252 = vmatpush1.bf16.msra.mxu0 0
  %253 = vmatprep.subr.bf16.mxu0 0
  %254 = vmatpush1.bf16.msra.mxu0 0
  %255 = vmatprep.subr.bf16.mxu0 0
  %256 = vmatpush1.bf16.msra.mxu0 0
  %257 = vmatprep.subr.bf16.mxu0 0
  %258 = vmatpush1.bf16.msra.mxu0 0
  %259 = vmatprep.mubr.bf16.mxu0 0
  %260 = vmatmul.mubr.bf16.gmra.mrb[0].mxu0 %v225
  %v261 = vpop.f32.mrb[0].mxu0
  %v262 = vadd.f32 %v211, %v261
  %v263 = vpop.f32.mrb[0].mxu0
  %v264 = vpop.f32.mrb[0].mxu0
  %v265 = vadd.f32 %v211, %v264
  %v266 = vpop.f32.mrb[0].mxu0
  %267 = vdwg.mxu0
  %270 = vrot.lane.b32.xlu0 %v262, 120
  %v271 = vpop.permute.xlu0 %270
  %272 = vrot.lane.b32.xlu0 %v265, 120
  %v273 = vpop.permute.xlu0 %272
  %276 = vrot.lane.b32.xlu0 %v262, 112
  %v277 = vpop.permute.xlu0 %276
  %278 = vrot.lane.b32.xlu0 %v265, 112
  %v279 = vpop.permute.xlu0 %278
  %282 = vrot.lane.b32.xlu0 %v262, 104
  %v283 = vpop.permute.xlu0 %282
  %284 = vrot.lane.b32.xlu0 %v265, 104
  %v285 = vpop.permute.xlu0 %284
  %v288 = vpack.c.bf16 %v265, %v262
  %v289 = vpack.c.bf16 %v273, %v271
  %v290 = vpack.c.bf16 %v279, %v277
  %v291 = vpack.c.bf16 %v285, %v283
  %296 = vrot.lane.b32.xlu0 %v288, 96
  %v297 = vpop.permute.xlu0 %296
  %298 = vrot.lane.b32.xlu0 %v289, 96
  %v299 = vpop.permute.xlu0 %298
  %300 = vrot.lane.b32.xlu0 %v290, 96
  %v301 = vpop.permute.xlu0 %300
  %302 = vrot.lane.b32.xlu0 %v291, 96
  %v303 = vpop.permute.xlu0 %302
  %vm304 = vcmask 64512
  %v306 = vsel %vm304, %v288, 0
  %v309 = vsel %vm304, %v289, 0
  %v312 = vsel %vm304, %v290, 0
  %v315 = vsel %vm304, %v291, 0
  %v318 = vsel %vm304, %v297, 0
  %v321 = vsel %vm304, %v299, 0
  %v324 = vsel %vm304, %v301, 0
  %v327 = vsel %vm304, %v303, 0
  %329 = vmatprep.subr.bf16.mxu0 0
  %330 = vmatpush1.bf16.xpose.msra.mxu0 %v318
  %331 = vmatprep.subr.bf16.mxu0 0
  %332 = vmatpush1.bf16.xpose.msra.mxu0 %v321
  %333 = vmatprep.subr.bf16.mxu0 0
  %334 = vmatpush1.bf16.xpose.msra.mxu0 %v324
  %335 = vmatprep.subr.bf16.mxu0 0
  %336 = vmatpush1.bf16.xpose.msra.mxu0 %v327
  %337 = vmatprep.subr.bf16.mxu0 0
  %338 = vmatpush1.bf16.xpose.msra.mxu0 0
  %339 = vmatprep.subr.bf16.mxu0 0
  %340 = vmatpush1.bf16.xpose.msra.mxu0 0
  %341 = vmatprep.subr.bf16.mxu0 0
  %342 = vmatpush1.bf16.xpose.msra.mxu0 0
  %343 = vmatprep.subr.bf16.mxu0 0
  %344 = vmatpush1.bf16.xpose.msra.mxu0 0
  %345 = vmatprep.subr.bf16.mxu0 0
  %346 = vmatpush1.bf16.xpose.msra.mxu0 0
  %347 = vmatprep.subr.bf16.mxu0 0
  %348 = vmatpush1.bf16.xpose.msra.mxu0 0
  %349 = vmatprep.subr.bf16.mxu0 0
  %350 = vmatpush1.bf16.xpose.msra.mxu0 0
  %351 = vmatprep.subr.bf16.mxu0 0
  %352 = vmatpush1.bf16.xpose.msra.mxu0 0
  %353 = vmatprep.subr.bf16.mxu0 0
  %354 = vmatpush1.bf16.xpose.msra.mxu0 0
  %355 = vmatprep.subr.bf16.mxu0 0
  %356 = vmatpush1.bf16.xpose.msra.mxu0 0
  %357 = vmatprep.subr.bf16.mxu0 0
  %358 = vmatpush1.bf16.xpose.msra.mxu0 0
  %359 = vmatprep.subr.bf16.mxu0 0
  %360 = vmatpush1.bf16.xpose.msra.mxu0 0
  %361 = vmatprep.mubr.bf16.mxu0 0
  %362 = vmatmul.mubr.bf16.gmra.mrb[0].mxu0 %v306
  %v363 = vpop.f32.mrb[0].mxu0
  %v364 = vadd.f32 0.0, %v363
  %v365 = vpop.f32.mrb[0].mxu0
  %v366 = vpop.f32.mrb[0].mxu0
  %v367 = vadd.f32 0.0, %v366
  %v368 = vpop.f32.mrb[0].mxu0
  %369 = vmatprep.mubr.bf16.mxu0 0
  %370 = vmatmul.mubr.bf16.gmra.mrb[0].mxu0 %v309
  %v371 = vpop.f32.mrb[0].mxu0
  %v372 = vadd.f32 0.0, %v371
  %v373 = vpop.f32.mrb[0].mxu0
  %v374 = vpop.f32.mrb[0].mxu0
  %v375 = vadd.f32 0.0, %v374
  %v376 = vpop.f32.mrb[0].mxu0
  %377 = vmatprep.mubr.bf16.mxu0 0
  %378 = vmatmul.mubr.bf16.gmra.mrb[0].mxu0 %v312
  %v379 = vpop.f32.mrb[0].mxu0
  %v380 = vadd.f32 0.0, %v379
  %v381 = vpop.f32.mrb[0].mxu0
  %v382 = vpop.f32.mrb[0].mxu0
  %v383 = vadd.f32 0.0, %v382
  %v384 = vpop.f32.mrb[0].mxu0
  %385 = vmatprep.mubr.bf16.mxu0 0
  %386 = vmatmul.mubr.bf16.gmra.mrb[0].mxu0 %v315
  %v387 = vpop.f32.mrb[0].mxu0
  %v388 = vadd.f32 0.0, %v387
  %v389 = vpop.f32.mrb[0].mxu0
  %v390 = vpop.f32.mrb[0].mxu0
  %v391 = vadd.f32 0.0, %v390
  %v392 = vpop.f32.mrb[0].mxu0
  %393 = vdwg.mxu0
  %v394 = vmul.f32 %v364, 0.35355338
  %v395 = vmul.f32 %v367, 0.35355338
  %v396 = vmul.f32 %v372, 0.35355338
  %v397 = vmul.f32 %v375, 0.35355338
  %v398 = vmul.f32 %v380, 0.35355338
  %v399 = vmul.f32 %v383, 0.35355338
  %v400 = vmul.f32 %v388, 0.35355338
  %v401 = vmul.f32 %v391, 0.35355338
  %v402 = vadd.f32 %v394, %v171
  %v403 = vadd.f32 %v395, %v172
  %v404 = vadd.f32 %v396, %v173
  %v405 = vadd.f32 %v397, %v174
  %v406 = vadd.f32 %v398, %v175
  %v407 = vadd.f32 %v399, %v176
  %v408 = vadd.f32 %v400, %v177
  %v409 = vadd.f32 %v401, %v178
  %v410 = vsel %vm69, %v402, -inf
  %411 = vmax.xlane.f32.xlu0 %v410
  %v412 = vpop.xlane.xlu0 %411
  %v413 = vsel %vm69, %v403, -inf
  %414 = vmax.xlane.f32.xlu0 %v413
  %v415 = vpop.xlane.xlu0 %414
  %v416 = vsel %vm69, %v404, -inf
  %417 = vmax.xlane.f32.xlu0 %v416
  %v418 = vpop.xlane.xlu0 %417
  %v419 = vsel %vm69, %v405, -inf
  %420 = vmax.xlane.f32.xlu0 %v419
  %v421 = vpop.xlane.xlu0 %420
  %v422 = vsel %vm69, %v406, -inf
  %423 = vmax.xlane.f32.xlu0 %v422
  %v424 = vpop.xlane.xlu0 %423
  %v425 = vsel %vm69, %v407, -inf
  %426 = vmax.xlane.f32.xlu0 %v425
  %v427 = vpop.xlane.xlu0 %426
  %v428 = vsel %vm69, %v408, -inf
  %429 = vmax.xlane.f32.xlu0 %v428
  %v430 = vpop.xlane.xlu0 %429
  %v431 = vsel %vm69, %v409, -inf
  %432 = vmax.xlane.f32.xlu0 %v431
  %v433 = vpop.xlane.xlu0 %432
  %v434 = vsub.f32 %v402, %v412
  %v435 = vsub.f32 %v403, %v415
  %v436 = vsub.f32 %v404, %v418
  %v437 = vsub.f32 %v405, %v421
  %v438 = vsub.f32 %v406, %v424
  %v439 = vsub.f32 %v407, %v427
  %v440 = vsub.f32 %v408, %v430
  %v441 = vsub.f32 %v409, %v433
  %v442 = vmul.f32 %v434, 1.442695
  %v443 = vpow.pop %v442
  %v444 = vmul.f32 %v435, 1.442695
  %v445 = vpow.pop %v444
  %v446 = vmul.f32 %v436, 1.442695
  %v447 = vpow.pop %v446
  %v448 = vmul.f32 %v437, 1.442695
  %v449 = vpow.pop %v448
  %v450 = vmul.f32 %v438, 1.442695
  %v451 = vpow.pop %v450
  %v452 = vmul.f32 %v439, 1.442695
  %v453 = vpow.pop %v452
  %v454 = vmul.f32 %v440, 1.442695
  %v455 = vpow.pop %v454
  %v456 = vmul.f32 %v441, 1.442695
  %v457 = vpow.pop %v456
  %v458 = vsel %vm69, %v443, 0.0
  %459 = vadd.xlane.f32.xlu0 %v458
  %v460 = vpop.xlane.xlu0 %459
  %v461 = vsel %vm69, %v445, 0.0
  %462 = vadd.xlane.f32.xlu0 %v461
  %v463 = vpop.xlane.xlu0 %462
  %v464 = vsel %vm69, %v447, 0.0
  %465 = vadd.xlane.f32.xlu0 %v464
  %v466 = vpop.xlane.xlu0 %465
  %v467 = vsel %vm69, %v449, 0.0
  %468 = vadd.xlane.f32.xlu0 %v467
  %v469 = vpop.xlane.xlu0 %468
  %v470 = vsel %vm69, %v451, 0.0
  %471 = vadd.xlane.f32.xlu0 %v470
  %v472 = vpop.xlane.xlu0 %471
  %v473 = vsel %vm69, %v453, 0.0
  %474 = vadd.xlane.f32.xlu0 %v473
  %v475 = vpop.xlane.xlu0 %474
  %v476 = vsel %vm69, %v455, 0.0
  %477 = vadd.xlane.f32.xlu0 %v476
  %v478 = vpop.xlane.xlu0 %477
  %v479 = vsel %vm69, %v457, 0.0
  %480 = vadd.xlane.f32.xlu0 %v479
  %v481 = vpop.xlane.xlu0 %480
  %v482 = vrcp.pop %v460
  %v483 = vrcp.pop %v463
  %v484 = vrcp.pop %v466
  %v485 = vrcp.pop %v469
  %v486 = vrcp.pop %v472
  %v487 = vrcp.pop %v475
  %v488 = vrcp.pop %v478
  %v489 = vrcp.pop %v481
  %v490 = vmul.f32 %v443, %v482
  %v491 = vmul.f32 %v445, %v483
  %v492 = vmul.f32 %v447, %v484
  %v493 = vmul.f32 %v449, %v485
  %v494 = vmul.f32 %v451, %v486
  %v495 = vmul.f32 %v453, %v487
  %v496 = vmul.f32 %v455, %v488
  %v497 = vmul.f32 %v457, %v489
  %v498 = vpack.c.bf16 %v491, %v490
  %v499 = vpack.c.bf16 %v493, %v492
  %v500 = vpack.c.bf16 %v495, %v494
  %v501 = vpack.c.bf16 %v497, %v496
  %502 = vrot.lane.b32.xlu0 %v288, 64
  %v503 = vpop.permute.xlu0 %502
  %504 = vrot.lane.b32.xlu0 %v289, 64
  %v505 = vpop.permute.xlu0 %504
  %506 = vrot.lane.b32.xlu0 %v290, 64
  %v507 = vpop.permute.xlu0 %506
  %508 = vrot.lane.b32.xlu0 %v291, 64
  %v509 = vpop.permute.xlu0 %508
  %v515 = vsel %vm69, %v498, 0
  %v518 = vsel %vm69, %v499, 0
  %v521 = vsel %vm69, %v500, 0
  %v524 = vsel %vm69, %v501, 0
  %526 = vmatprep.subr.bf16.mxu0 0
  %527 = vmatpush1.bf16.msra.mxu0 %v503
  %528 = vmatprep.subr.bf16.mxu0 0
  %529 = vmatpush1.bf16.msra.mxu0 %v505
  %530 = vmatprep.subr.bf16.mxu0 0
  %531 = vmatpush1.bf16.msra.mxu0 %v507
  %532 = vmatprep.subr.bf16.mxu0 0
  %533 = vmatpush1.bf16.msra.mxu0 %v509
  %534 = vmatprep.subr.bf16.mxu0 0
  %535 = vmatpush1.bf16.msra.mxu0 0
  %536 = vmatprep.subr.bf16.mxu0 0
  %537 = vmatpush1.bf16.msra.mxu0 0
  %538 = vmatprep.subr.bf16.mxu0 0
  %539 = vmatpush1.bf16.msra.mxu0 0
  %540 = vmatprep.subr.bf16.mxu0 0
  %541 = vmatpush1.bf16.msra.mxu0 0
  %542 = vmatprep.subr.bf16.mxu0 0
  %543 = vmatpush1.bf16.msra.mxu0 0
  %544 = vmatprep.subr.bf16.mxu0 0
  %545 = vmatpush1.bf16.msra.mxu0 0
  %546 = vmatprep.subr.bf16.mxu0 0
  %547 = vmatpush1.bf16.msra.mxu0 0
  %548 = vmatprep.subr.bf16.mxu0 0
  %549 = vmatpush1.bf16.msra.mxu0 0
  %550 = vmatprep.subr.bf16.mxu0 0
  %551 = vmatpush1.bf16.msra.mxu0 0
  %552 = vmatprep.subr.bf16.mxu0 0
  %553 = vmatpush1.bf16.msra.mxu0 0
  %554 = vmatprep.subr.bf16.mxu0 0
  %555 = vmatpush1.bf16.msra.mxu0 0
  %556 = vmatprep.subr.bf16.mxu0 0
  %557 = vmatpush1.bf16.msra.mxu0 0
  %558 = vmatprep.mubr.bf16.mxu0 0
  %559 = vmatmul.mubr.bf16.gmra.mrb[0].mxu0 %v515
  %v560 = vpop.f32.mrb[0].mxu0
  %v561 = vadd.f32 0.0, %v560
  %v562 = vpop.f32.mrb[0].mxu0
  %v563 = vpop.f32.mrb[0].mxu0
  %v564 = vadd.f32 0.0, %v563
  %v565 = vpop.f32.mrb[0].mxu0
  %566 = vmatprep.mubr.bf16.mxu0 0
  %567 = vmatmul.mubr.bf16.gmra.mrb[0].mxu0 %v518
  %v568 = vpop.f32.mrb[0].mxu0
  %v569 = vadd.f32 0.0, %v568
  %v570 = vpop.f32.mrb[0].mxu0
  %v571 = vpop.f32.mrb[0].mxu0
  %v572 = vadd.f32 0.0, %v571
  %v573 = vpop.f32.mrb[0].mxu0
  %574 = vmatprep.mubr.bf16.mxu0 0
  %575 = vmatmul.mubr.bf16.gmra.mrb[0].mxu0 %v521
  %v576 = vpop.f32.mrb[0].mxu0
  %v577 = vadd.f32 0.0, %v576
  %v578 = vpop.f32.mrb[0].mxu0
  %v579 = vpop.f32.mrb[0].mxu0
  %v580 = vadd.f32 0.0, %v579
  %v581 = vpop.f32.mrb[0].mxu0
  %582 = vmatprep.mubr.bf16.mxu0 0
  %583 = vmatmul.mubr.bf16.gmra.mrb[0].mxu0 %v524
  %v584 = vpop.f32.mrb[0].mxu0
  %v585 = vadd.f32 0.0, %v584
  %v586 = vpop.f32.mrb[0].mxu0
  %v587 = vpop.f32.mrb[0].mxu0
  %v588 = vadd.f32 0.0, %v587
  %v589 = vpop.f32.mrb[0].mxu0
  %590 = vdwg.mxu0
  %593 = vrot.lane.b32.xlu0 %v569, 8
  %v594 = vpop.permute.xlu0 %593
  %595 = vrot.lane.b32.xlu0 %v572, 8
  %v596 = vpop.permute.xlu0 %595
  %601 = vrot.lane.b32.xlu0 %v577, 16
  %v602 = vpop.permute.xlu0 %601
  %603 = vrot.lane.b32.xlu0 %v580, 16
  %v604 = vpop.permute.xlu0 %603
  %609 = vrot.lane.b32.xlu0 %v585, 24
  %v610 = vpop.permute.xlu0 %609
  %611 = vrot.lane.b32.xlu0 %v588, 24
  %v612 = vpop.permute.xlu0 %611
  %v615 = vsel %vm304, %v561, %v594
  %v616 = vsel %vm304, %v564, %v596
  %v617 = vsel %vm124, %v615, %v602
  %v618 = vsel %vm124, %v616, %v604
  %vm619 = vcmask 195584
  %v620 = vsel %vm619, %v617, %v610
  %v621 = vsel %vm619, %v618, %v612
  %v622 = vpack.c.bf16 %v621, %v620
  %v623 = vlaneseq
  %v624 = vshrl.u32 %v623, 7
  %v625 = vsub.s32 0, %v624
  %v626 = vrot.slane %v200, %v625
  %v631 = vunpack.c.l.b16 %v183
  %v632 = vunpack.c.l.b16 %v184
  %v633 = vunpack.c.l.b16 %v185
  %v634 = vunpack.c.l.b16 %v186
  %v635 = vpack.c.b16 %v632, %v631
  %v636 = vpack.c.b16 %v634, %v633
  %v640 = vsel %vm126, %v622, 0
  %642 = vmatprep.subr.bf16.mxu0 0
  %643 = vmatpush1.bf16.msra.mxu0 %v635
  %644 = vmatprep.subr.bf16.mxu0 0
  %645 = vmatpush1.bf16.msra.mxu0 %v636
  %646 = vmatprep.subr.bf16.mxu0 0
  %647 = vmatpush1.bf16.msra.mxu0 0
  %648 = vmatprep.subr.bf16.mxu0 0
  %649 = vmatpush1.bf16.msra.mxu0 0
  %650 = vmatprep.subr.bf16.mxu0 0
  %651 = vmatpush1.bf16.msra.mxu0 0
  %652 = vmatprep.subr.bf16.mxu0 0
  %653 = vmatpush1.bf16.msra.mxu0 0
  %654 = vmatprep.subr.bf16.mxu0 0
  %655 = vmatpush1.bf16.msra.mxu0 0
  %656 = vmatprep.subr.bf16.mxu0 0
  %657 = vmatpush1.bf16.msra.mxu0 0
  %658 = vmatprep.subr.bf16.mxu0 0
  %659 = vmatpush1.bf16.msra.mxu0 0
  %660 = vmatprep.subr.bf16.mxu0 0
  %661 = vmatpush1.bf16.msra.mxu0 0
  %662 = vmatprep.subr.bf16.mxu0 0
  %663 = vmatpush1.bf16.msra.mxu0 0
  %664 = vmatprep.subr.bf16.mxu0 0
  %665 = vmatpush1.bf16.msra.mxu0 0
  %666 = vmatprep.subr.bf16.mxu0 0
  %667 = vmatpush1.bf16.msra.mxu0 0
  %668 = vmatprep.subr.bf16.mxu0 0
  %669 = vmatpush1.bf16.msra.mxu0 0
  %670 = vmatprep.subr.bf16.mxu0 0
  %671 = vmatpush1.bf16.msra.mxu0 0
  %672 = vmatprep.subr.bf16.mxu0 0
  %673 = vmatpush1.bf16.msra.mxu0 0
  %674 = vmatprep.mubr.bf16.mxu0 0
  %675 = vmatmul.mubr.bf16.gmra.mrb[0].mxu0 %v640
  %v676 = vpop.f32.mrb[0].mxu0
  %v677 = vadd.f32 %v626, %v676
  %v678 = vpop.f32.mrb[0].mxu0
  %v679 = vpop.f32.mrb[0].mxu0
  %v680 = vadd.f32 %v626, %v679
  %v681 = vpop.f32.mrb[0].mxu0
  %682 = vdwg.mxu0
  %v683 = vadd.f32 %v108, %v677
  %v684 = vadd.f32 %v111, %v680
  %v685 = vsel %vm126, %v683, 0.0
  %686 = vadd.xlane.f32.xlu0 %v685
  %v687 = vpop.xlane.xlu0 %686
  %v688 = vsel %vm126, %v684, 0.0
  %689 = vadd.xlane.f32.xlu0 %v688
  %v690 = vpop.xlane.xlu0 %689
  %v691 = vrcp.pop 32.0
  %v692 = vmul.f32 %v687, %v691
  %v693 = vmul.f32 %v690, %v691
  %v694 = vsub.f32 %v683, %v692
  %v695 = vsub.f32 %v684, %v693
  %v696 = vmul.f32 %v694, %v694
  %v697 = vmul.f32 %v695, %v695
  %v698 = vsel %vm126, %v696, 0.0
  %699 = vadd.xlane.f32.xlu0 %v698
  %v700 = vpop.xlane.xlu0 %699
  %v701 = vsel %vm126, %v697, 0.0
  %702 = vadd.xlane.f32.xlu0 %v701
  %v703 = vpop.xlane.xlu0 %702
  %v704 = vmul.f32 %v700, %v691
  %v705 = vmul.f32 %v703, %v691
  %v706 = vadd.f32 %v704, 1e-05
  %v707 = vadd.f32 %v705, 1e-05
  %v708 = vrsqrt.pop %v706
  %v709 = vrsqrt.pop %v707
  %v710 = vmul.f32 %v694, %v708
  %v711 = vmul.f32 %v695, %v709
  %v712 = vlaneseq
  %v713 = vshrl.u32 %v712, 7
  %v714 = vsub.s32 0, %v713
  %v715 = vrot.slane %v201, %v714
  %v716 = vmul.f32 %v710, %v715
  %v717 = vmul.f32 %v711, %v715
  %v718 = vlaneseq
  %v719 = vshrl.u32 %v718, 7
  %v720 = vsub.s32 0, %v719
  %v721 = vrot.slane %v202, %v720
  %v722 = vadd.f32 %v716, %v721
  %v723 = vadd.f32 %v717, %v721
  %v724 = vpack.c.bf16 %v723, %v722
  %v725 = vlaneseq
  %v726 = vshrl.u32 %v725, 7
  %v727 = vsub.s32 0, %v726
  %v728 = vrot.slane %v203, %v727
  %v733 = vunpack.c.l.b16 %v187
  %v734 = vunpack.c.l.b16 %v188
  %v735 = vunpack.c.l.b16 %v189
  %v736 = vunpack.c.l.b16 %v190
  %v737 = vpack.c.b16 %v734, %v733
  %v738 = vpack.c.b16 %v736, %v735
  %v742 = vsel %vm126, %v724, 0
  %744 = vmatprep.subr.bf16.mxu0 0
  %745 = vmatpush1.bf16.msra.mxu0 %v737
  %746 = vmatprep.subr.bf16.mxu0 0
  %747 = vmatpush1.bf16.msra.mxu0 %v738
  %748 = vmatprep.subr.bf16.mxu0 0
  %749 = vmatpush1.bf16.msra.mxu0 0
  %750 = vmatprep.subr.bf16.mxu0 0
  %751 = vmatpush1.bf16.msra.mxu0 0
  %752 = vmatprep.subr.bf16.mxu0 0
  %753 = vmatpush1.bf16.msra.mxu0 0
  %754 = vmatprep.subr.bf16.mxu0 0
  %755 = vmatpush1.bf16.msra.mxu0 0
  %756 = vmatprep.subr.bf16.mxu0 0
  %757 = vmatpush1.bf16.msra.mxu0 0
  %758 = vmatprep.subr.bf16.mxu0 0
  %759 = vmatpush1.bf16.msra.mxu0 0
  %760 = vmatprep.subr.bf16.mxu0 0
  %761 = vmatpush1.bf16.msra.mxu0 0
  %762 = vmatprep.subr.bf16.mxu0 0
  %763 = vmatpush1.bf16.msra.mxu0 0
  %764 = vmatprep.subr.bf16.mxu0 0
  %765 = vmatpush1.bf16.msra.mxu0 0
  %766 = vmatprep.subr.bf16.mxu0 0
  %767 = vmatpush1.bf16.msra.mxu0 0
  %768 = vmatprep.subr.bf16.mxu0 0
  %769 = vmatpush1.bf16.msra.mxu0 0
  %770 = vmatprep.subr.bf16.mxu0 0
  %771 = vmatpush1.bf16.msra.mxu0 0
  %772 = vmatprep.subr.bf16.mxu0 0
  %773 = vmatpush1.bf16.msra.mxu0 0
  %774 = vmatprep.subr.bf16.mxu0 0
  %775 = vmatpush1.bf16.msra.mxu0 0
  %776 = vmatprep.mubr.bf16.mxu0 0
  %777 = vmatmul.mubr.bf16.gmra.mrb[0].mxu0 %v742
  %v778 = vpop.f32.mrb[0].mxu0
  %v779 = vadd.f32 %v728, %v778
  %v780 = vpop.f32.mrb[0].mxu0
  %v781 = vpop.f32.mrb[0].mxu0
  %v782 = vadd.f32 %v728, %v781
  %v783 = vpop.f32.mrb[0].mxu0
  %784 = vdwg.mxu0
  %v785 = vmax.f32 %v779, 0.0
  %v786 = vmax.f32 %v782, 0.0
  %v787 = vpack.c.bf16 %v786, %v785
  %v788 = vlaneseq
  %v789 = vshrl.u32 %v788, 7
  %v790 = vsub.s32 0, %v789
  %v791 = vrot.slane %v204, %v790
  %v800 = vunpack.c.l.b16 %v191
  %v801 = vunpack.c.l.b16 %v192
  %v802 = vunpack.c.l.b16 %v193
  %v803 = vunpack.c.l.b16 %v194
  %v804 = vunpack.c.l.b16 %v195
  %v805 = vunpack.c.l.b16 %v196
  %v806 = vunpack.c.l.b16 %v197
  %v807 = vunpack.c.l.b16 %v198
  %v808 = vpack.c.b16 %v801, %v800
  %v809 = vpack.c.b16 %v803, %v802
  %v810 = vpack.c.b16 %v805, %v804
  %v811 = vpack.c.b16 %v807, %v806
  %v817 = vsel %vm69, %v787, 0
  %819 = vmatprep.subr.bf16.mxu0 0
  %820 = vmatpush1.bf16.msra.mxu0 %v808
  %821 = vmatprep.subr.bf16.mxu0 0
  %822 = vmatpush1.bf16.msra.mxu0 %v809
  %823 = vmatprep.subr.bf16.mxu0 0
  %824 = vmatpush1.bf16.msra.mxu0 %v810
  %825 = vmatprep.subr.bf16.mxu0 0
  %826 = vmatpush1.bf16.msra.mxu0 %v811
  %827 = vmatprep.subr.bf16.mxu0 0
  %828 = vmatpush1.bf16.msra.mxu0 0
  %829 = vmatprep.subr.bf16.mxu0 0
  %830 = vmatpush1.bf16.msra.mxu0 0
  %831 = vmatprep.subr.bf16.mxu0 0
  %832 = vmatpush1.bf16.msra.mxu0 0
  %833 = vmatprep.subr.bf16.mxu0 0
  %834 = vmatpush1.bf16.msra.mxu0 0
  %835 = vmatprep.subr.bf16.mxu0 0
  %836 = vmatpush1.bf16.msra.mxu0 0
  %837 = vmatprep.subr.bf16.mxu0 0
  %838 = vmatpush1.bf16.msra.mxu0 0
  %839 = vmatprep.subr.bf16.mxu0 0
  %840 = vmatpush1.bf16.msra.mxu0 0
  %841 = vmatprep.subr.bf16.mxu0 0
  %842 = vmatpush1.bf16.msra.mxu0 0
  %843 = vmatprep.subr.bf16.mxu0 0
  %844 = vmatpush1.bf16.msra.mxu0 0
  %845 = vmatprep.subr.bf16.mxu0 0
  %846 = vmatpush1.bf16.msra.mxu0 0
  %847 = vmatprep.subr.bf16.mxu0 0
  %848 = vmatpush1.bf16.msra.mxu0 0
  %849 = vmatprep.subr.bf16.mxu0 0
  %850 = vmatpush1.bf16.msra.mxu0 0
  %851 = vmatprep.mubr.bf16.mxu0 0
  %852 = vmatmul.mubr.bf16.gmra.mrb[0].mxu0 %v817
  %v853 = vpop.f32.mrb[0].mxu0
  %v854 = vadd.f32 %v791, %v853
  %v855 = vpop.f32.mrb[0].mxu0
  %v856 = vpop.f32.mrb[0].mxu0
  %v857 = vadd.f32 %v791, %v856
  %v858 = vpop.f32.mrb[0].mxu0
  %859 = vdwg.mxu0
  %v860 = vadd.f32 %v722, %v854
  %v861 = vadd.f32 %v723, %v857
  %v862 = vsel %vm126, %v860, 0.0
  %863 = vadd.xlane.f32.xlu0 %v862
  %v864 = vpop.xlane.xlu0 %863
  %v865 = vsel %vm126, %v861, 0.0
  %866 = vadd.xlane.f32.xlu0 %v865
  %v867 = vpop.xlane.xlu0 %866
  %v868 = vmul.f32 %v864, %v691
  %v869 = vmul.f32 %v867, %v691
  %v870 = vsub.f32 %v860, %v868
  %v871 = vsub.f32 %v861, %v869
  %v872 = vmul.f32 %v870, %v870
  %v873 = vmul.f32 %v871, %v871
  %v874 = vsel %vm126, %v872, 0.0
  %875 = vadd.xlane.f32.xlu0 %v874
  %v876 = vpop.xlane.xlu0 %875
  %v877 = vsel %vm126, %v873, 0.0
  %878 = vadd.xlane.f32.xlu0 %v877
  %v879 = vpop.xlane.xlu0 %878
  %v880 = vmul.f32 %v876, %v691
  %v881 = vmul.f32 %v879, %v691
  %v882 = vadd.f32 %v880, 1e-05
  %v883 = vadd.f32 %v881, 1e-05
  %v884 = vrsqrt.pop %v882
  %v885 = vrsqrt.pop %v883
  %v886 = vmul.f32 %v870, %v884
  %v887 = vmul.f32 %v871, %v885
  %v888 = vlaneseq
  %v889 = vshrl.u32 %v888, 7
  %v890 = vsub.s32 0, %v889
  %v891 = vrot.slane %v205, %v890
  %v892 = vmul.f32 %v886, %v891
  %v893 = vmul.f32 %v887, %v891
  %v894 = vlaneseq
  %v895 = vshrl.u32 %v894, 7
  %v896 = vsub.s32 0, %v895
  %v897 = vrot.slane %v206, %v896
  %v898 = vadd.f32 %v892, %v897
  %v899 = vadd.f32 %v893, %v897
  %v900 = vld [vmem:[%s1 + $0x70] sm:$0xf]
  %v901 = vld [vmem:[%s1 + $0x74] sm:$0xf]
  %v902 = vld [vmem:[%s1 + $0x78] sm:$0xf]
  %v903 = vld [vmem:[%s1 + $0x7c] sm:$0xf]
  %v904 = vld [vmem:[%s1 + $0x80] sm:$0xf]
  %v905 = vld [vmem:[%s1 + $0x84] sm:$0xf]
  %v906 = vld [vmem:[%s1 + $0x88] sm:$0xf]
  %v907 = vld [vmem:[%s1 + $0x8c] sm:$0xf]
  %v908 = vld [vmem:[%s1 + $0x90] sm:$0xf]
  %v909 = vld [vmem:[%s1 + $0x94] sm:$0xf]
  %v910 = vld [vmem:[%s1 + $0x98] sm:$0xf]
  %v911 = vld [vmem:[%s1 + $0x9c] sm:$0xf]
  %v912 = vld [vmem:[%s1 + $0xa0] sm:$0xf]
  %v913 = vld [vmem:[%s1 + $0xa4] sm:$0xf]
  %v914 = vld [vmem:[%s1 + $0xa8] sm:$0xf]
  %v915 = vld [vmem:[%s1 + $0xac] sm:$0xf]
  %v916 = vld [vmem:[%s1 + $0xb0] sm:$0xf]
  %v917 = vld [vmem:[%s1 + $0xb4] sm:$0xf]
  %v918 = vld [vmem:[%s1 + $0xb8] sm:$0xf]
  %v919 = vld [vmem:[%s1 + $0xbc] sm:$0xf]
  %v920 = vld [vmem:[%s2 + $0x18] sm:$0x1]
  %v921 = vld [vmem:[%s2 + $0x19] sm:$0x1]
  %v922 = vld [vmem:[%s2 + $0x1a] sm:$0x1]
  %v923 = vld [vmem:[%s2 + $0x1b] sm:$0x1]
  %v924 = vld [vmem:[%s2 + $0x1c] sm:$0x1]
  %v925 = vld [vmem:[%s2 + $0x1d] sm:$0x1]
  %v926 = vld [vmem:[%s2 + $0x1e] sm:$0x1]
  %v927 = vld [vmem:[%s2 + $0x1f] sm:$0x1]
  %v928 = vpack.c.bf16 %v899, %v898
  %v929 = vlaneseq
  %v930 = vshrl.u32 %v929, 7
  %v931 = vsub.s32 0, %v930
  %v932 = vrot.slane %v920, %v931
  %v937 = vunpack.c.l.b16 %v900
  %v938 = vunpack.c.l.b16 %v901
  %v939 = vunpack.c.l.b16 %v902
  %v940 = vunpack.c.l.b16 %v903
  %v941 = vpack.c.b16 %v938, %v937
  %v942 = vpack.c.b16 %v940, %v939
  %v946 = vsel %vm126, %v928, 0
  %948 = vmatprep.subr.bf16.mxu0 0
  %949 = vmatpush1.bf16.msra.mxu0 %v941
  %950 = vmatprep.subr.bf16.mxu0 0
  %951 = vmatpush1.bf16.msra.mxu0 %v942
  %952 = vmatprep.subr.bf16.mxu0 0
  %953 = vmatpush1.bf16.msra.mxu0 0
  %954 = vmatprep.subr.bf16.mxu0 0
  %955 = vmatpush1.bf16.msra.mxu0 0
  %956 = vmatprep.subr.bf16.mxu0 0
  %957 = vmatpush1.bf16.msra.mxu0 0
  %958 = vmatprep.subr.bf16.mxu0 0
  %959 = vmatpush1.bf16.msra.mxu0 0
  %960 = vmatprep.subr.bf16.mxu0 0
  %961 = vmatpush1.bf16.msra.mxu0 0
  %962 = vmatprep.subr.bf16.mxu0 0
  %963 = vmatpush1.bf16.msra.mxu0 0
  %964 = vmatprep.subr.bf16.mxu0 0
  %965 = vmatpush1.bf16.msra.mxu0 0
  %966 = vmatprep.subr.bf16.mxu0 0
  %967 = vmatpush1.bf16.msra.mxu0 0
  %968 = vmatprep.subr.bf16.mxu0 0
  %969 = vmatpush1.bf16.msra.mxu0 0
  %970 = vmatprep.subr.bf16.mxu0 0
  %971 = vmatpush1.bf16.msra.mxu0 0
  %972 = vmatprep.subr.bf16.mxu0 0
  %973 = vmatpush1.bf16.msra.mxu0 0
  %974 = vmatprep.subr.bf16.mxu0 0
  %975 = vmatpush1.bf16.msra.mxu0 0
  %976 = vmatprep.subr.bf16.mxu0 0
  %977 = vmatpush1.bf16.msra.mxu0 0
  %978 = vmatprep.subr.bf16.mxu0 0
  %979 = vmatpush1.bf16.msra.mxu0 0
  %980 = vmatprep.mubr.bf16.mxu0 0
  %981 = vmatmul.mubr.bf16.gmra.mrb[0].mxu0 %v946
  %v982 = vpop.f32.mrb[0].mxu0
  %v983 = vadd.f32 %v932, %v982
  %v984 = vpop.f32.mrb[0].mxu0
  %v985 = vpop.f32.mrb[0].mxu0
  %v986 = vadd.f32 %v932, %v985
  %v987 = vpop.f32.mrb[0].mxu0
  %988 = vdwg.mxu0
  %991 = vrot.lane.b32.xlu0 %v983, 120
  %v992 = vpop.permute.xlu0 %991
  %993 = vrot.lane.b32.xlu0 %v986, 120
  %v994 = vpop.permute.xlu0 %993
  %997 = vrot.lane.b32.xlu0 %v983, 112
  %v998 = vpop.permute.xlu0 %997
  %999 = vrot.lane.b32.xlu0 %v986, 112
  %v1000 = vpop.permute.xlu0 %999
  %1003 = vrot.lane.b32.xlu0 %v983, 104
  %v1004 = vpop.permute.xlu0 %1003
  %1005 = vrot.lane.b32.xlu0 %v986, 104
  %v1006 = vpop.permute.xlu0 %1005
  %v1009 = vpack.c.bf16 %v986, %v983
  %v1010 = vpack.c.bf16 %v994, %v992
  %v1011 = vpack.c.bf16 %v1000, %v998
  %v1012 = vpack.c.bf16 %v1006, %v1004
  %1017 = vrot.lane.b32.xlu0 %v1009, 96
  %v1018 = vpop.permute.xlu0 %1017
  %1019 = vrot.lane.b32.xlu0 %v1010, 96
  %v1020 = vpop.permute.xlu0 %1019
  %1021 = vrot.lane.b32.xlu0 %v1011, 96
  %v1022 = vpop.permute.xlu0 %1021
  %1023 = vrot.lane.b32.xlu0 %v1012, 96
  %v1024 = vpop.permute.xlu0 %1023
  %v1026 = vsel %vm304, %v1009, 0
  %v1029 = vsel %vm304, %v1010, 0
  %v1032 = vsel %vm304, %v1011, 0
  %v1035 = vsel %vm304, %v1012, 0
  %v1038 = vsel %vm304, %v1018, 0
  %v1041 = vsel %vm304, %v1020, 0
  %v1044 = vsel %vm304, %v1022, 0
  %v1047 = vsel %vm304, %v1024, 0
  %1049 = vmatprep.subr.bf16.mxu0 0
  %1050 = vmatpush1.bf16.xpose.msra.mxu0 %v1038
  %1051 = vmatprep.subr.bf16.mxu0 0
  %1052 = vmatpush1.bf16.xpose.msra.mxu0 %v1041
  %1053 = vmatprep.subr.bf16.mxu0 0
  %1054 = vmatpush1.bf16.xpose.msra.mxu0 %v1044
  %1055 = vmatprep.subr.bf16.mxu0 0
  %1056 = vmatpush1.bf16.xpose.msra.mxu0 %v1047
  %1057 = vmatprep.subr.bf16.mxu0 0
  %1058 = vmatpush1.bf16.xpose.msra.mxu0 0
  %1059 = vmatprep.subr.bf16.mxu0 0
  %1060 = vmatpush1.bf16.xpose.msra.mxu0 0
  %1061 = vmatprep.subr.bf16.mxu0 0
  %1062 = vmatpush1.bf16.xpose.msra.mxu0 0
  %1063 = vmatprep.subr.bf16.mxu0 0
  %1064 = vmatpush1.bf16.xpose.msra.mxu0 0
  %1065 = vmatprep.subr.bf16.mxu0 0
  %1066 = vmatpush1.bf16.xpose.msra.mxu0 0
  %1067 = vmatprep.subr.bf16.mxu0 0
  %1068 = vmatpush1.bf16.xpose.msra.mxu0 0
  %1069 = vmatprep.subr.bf16.mxu0 0
  %1070 = vmatpush1.bf16.xpose.msra.mxu0 0
  %1071 = vmatprep.subr.bf16.mxu0 0
  %1072 = vmatpush1.bf16.xpose.msra.mxu0 0
  %1073 = vmatprep.subr.bf16.mxu0 0
  %1074 = vmatpush1.bf16.xpose.msra.mxu0 0
  %1075 = vmatprep.subr.bf16.mxu0 0
  %1076 = vmatpush1.bf16.xpose.msra.mxu0 0
  %1077 = vmatprep.subr.bf16.mxu0 0
  %1078 = vmatpush1.bf16.xpose.msra.mxu0 0
  %1079 = vmatprep.subr.bf16.mxu0 0
  %1080 = vmatpush1.bf16.xpose.msra.mxu0 0
  %1081 = vmatprep.mubr.bf16.mxu0 0
  %1082 = vmatmul.mubr.bf16.gmra.mrb[0].mxu0 %v1026
  %v1083 = vpop.f32.mrb[0].mxu0
  %v1084 = vadd.f32 0.0, %v1083
  %v1085 = vpop.f32.mrb[0].mxu0
  %v1086 = vpop.f32.mrb[0].mxu0
  %v1087 = vadd.f32 0.0, %v1086
  %v1088 = vpop.f32.mrb[0].mxu0
  %1089 = vmatprep.mubr.bf16.mxu0 0
  %1090 = vmatmul.mubr.bf16.gmra.mrb[0].mxu0 %v1029
  %v1091 = vpop.f32.mrb[0].mxu0
  %v1092 = vadd.f32 0.0, %v1091
  %v1093 = vpop.f32.mrb[0].mxu0
  %v1094 = vpop.f32.mrb[0].mxu0
  %v1095 = vadd.f32 0.0, %v1094
  %v1096 = vpop.f32.mrb[0].mxu0
  %1097 = vmatprep.mubr.bf16.mxu0 0
  %1098 = vmatmul.mubr.bf16.gmra.mrb[0].mxu0 %v1032
  %v1099 = vpop.f32.mrb[0].mxu0
  %v1100 = vadd.f32 0.0, %v1099
  %v1101 = vpop.f32.mrb[0].mxu0
  %v1102 = vpop.f32.mrb[0].mxu0
  %v1103 = vadd.f32 0.0, %v1102
  %v1104 = vpop.f32.mrb[0].mxu0
  %1105 = vmatprep.mubr.bf16.mxu0 0
  %1106 = vmatmul.mubr.bf16.gmra.mrb[0].mxu0 %v1035
  %v1107 = vpop.f32.mrb[0].mxu0
  %v1108 = vadd.f32 0.0, %v1107
  %v1109 = vpop.f32.mrb[0].mxu0
  %v1110 = vpop.f32.mrb[0].mxu0
  %v1111 = vadd.f32 0.0, %v1110
  %v1112 = vpop.f32.mrb[0].mxu0
  %1113 = vdwg.mxu0
  %v1114 = vmul.f32 %v1084, 0.35355338
  %v1115 = vmul.f32 %v1087, 0.35355338
  %v1116 = vmul.f32 %v1092, 0.35355338
  %v1117 = vmul.f32 %v1095, 0.35355338
  %v1118 = vmul.f32 %v1100, 0.35355338
  %v1119 = vmul.f32 %v1103, 0.35355338
  %v1120 = vmul.f32 %v1108, 0.35355338
  %v1121 = vmul.f32 %v1111, 0.35355338
  %v1122 = vadd.f32 %v1114, %v171
  %v1123 = vadd.f32 %v1115, %v172
  %v1124 = vadd.f32 %v1116, %v173
  %v1125 = vadd.f32 %v1117, %v174
  %v1126 = vadd.f32 %v1118, %v175
  %v1127 = vadd.f32 %v1119, %v176
  %v1128 = vadd.f32 %v1120, %v177
  %v1129 = vadd.f32 %v1121, %v178
  %v1130 = vsel %vm69, %v1122, -inf
  %1131 = vmax.xlane.f32.xlu0 %v1130
  %v1132 = vpop.xlane.xlu0 %1131
  %v1133 = vsel %vm69, %v1123, -inf
  %1134 = vmax.xlane.f32.xlu0 %v1133
  %v1135 = vpop.xlane.xlu0 %1134
  %v1136 = vsel %vm69, %v1124, -inf
  %1137 = vmax.xlane.f32.xlu0 %v1136
  %v1138 = vpop.xlane.xlu0 %1137
  %v1139 = vsel %vm69, %v1125, -inf
  %1140 = vmax.xlane.f32.xlu0 %v1139
  %v1141 = vpop.xlane.xlu0 %1140
  %v1142 = vsel %vm69, %v1126, -inf
  %1143 = vmax.xlane.f32.xlu0 %v1142
  %v1144 = vpop.xlane.xlu0 %1143
  %v1145 = vsel %vm69, %v1127, -inf
  %1146 = vmax.xlane.f32.xlu0 %v1145
  %v1147 = vpop.xlane.xlu0 %1146
  %v1148 = vsel %vm69, %v1128, -inf
  %1149 = vmax.xlane.f32.xlu0 %v1148
  %v1150 = vpop.xlane.xlu0 %1149
  %v1151 = vsel %vm69, %v1129, -inf
  %1152 = vmax.xlane.f32.xlu0 %v1151
  %v1153 = vpop.xlane.xlu0 %1152
  %v1154 = vsub.f32 %v1122, %v1132
  %v1155 = vsub.f32 %v1123, %v1135
  %v1156 = vsub.f32 %v1124, %v1138
  %v1157 = vsub.f32 %v1125, %v1141
  %v1158 = vsub.f32 %v1126, %v1144
  %v1159 = vsub.f32 %v1127, %v1147
  %v1160 = vsub.f32 %v1128, %v1150
  %v1161 = vsub.f32 %v1129, %v1153
  %v1162 = vmul.f32 %v1154, 1.442695
  %v1163 = vpow.pop %v1162
  %v1164 = vmul.f32 %v1155, 1.442695
  %v1165 = vpow.pop %v1164
  %v1166 = vmul.f32 %v1156, 1.442695
  %v1167 = vpow.pop %v1166
  %v1168 = vmul.f32 %v1157, 1.442695
  %v1169 = vpow.pop %v1168
  %v1170 = vmul.f32 %v1158, 1.442695
  %v1171 = vpow.pop %v1170
  %v1172 = vmul.f32 %v1159, 1.442695
  %v1173 = vpow.pop %v1172
  %v1174 = vmul.f32 %v1160, 1.442695
  %v1175 = vpow.pop %v1174
  %v1176 = vmul.f32 %v1161, 1.442695
  %v1177 = vpow.pop %v1176
  %v1178 = vsel %vm69, %v1163, 0.0
  %1179 = vadd.xlane.f32.xlu0 %v1178
  %v1180 = vpop.xlane.xlu0 %1179
  %v1181 = vsel %vm69, %v1165, 0.0
  %1182 = vadd.xlane.f32.xlu0 %v1181
  %v1183 = vpop.xlane.xlu0 %1182
  %v1184 = vsel %vm69, %v1167, 0.0
  %1185 = vadd.xlane.f32.xlu0 %v1184
  %v1186 = vpop.xlane.xlu0 %1185
  %v1187 = vsel %vm69, %v1169, 0.0
  %1188 = vadd.xlane.f32.xlu0 %v1187
  %v1189 = vpop.xlane.xlu0 %1188
  %v1190 = vsel %vm69, %v1171, 0.0
  %1191 = vadd.xlane.f32.xlu0 %v1190
  %v1192 = vpop.xlane.xlu0 %1191
  %v1193 = vsel %vm69, %v1173, 0.0
  %1194 = vadd.xlane.f32.xlu0 %v1193
  %v1195 = vpop.xlane.xlu0 %1194
  %v1196 = vsel %vm69, %v1175, 0.0
  %1197 = vadd.xlane.f32.xlu0 %v1196
  %v1198 = vpop.xlane.xlu0 %1197
  %v1199 = vsel %vm69, %v1177, 0.0
  %1200 = vadd.xlane.f32.xlu0 %v1199
  %v1201 = vpop.xlane.xlu0 %1200
  %v1202 = vrcp.pop %v1180
  %v1203 = vrcp.pop %v1183
  %v1204 = vrcp.pop %v1186
  %v1205 = vrcp.pop %v1189
  %v1206 = vrcp.pop %v1192
  %v1207 = vrcp.pop %v1195
  %v1208 = vrcp.pop %v1198
  %v1209 = vrcp.pop %v1201
  %v1210 = vmul.f32 %v1163, %v1202
  %v1211 = vmul.f32 %v1165, %v1203
  %v1212 = vmul.f32 %v1167, %v1204
  %v1213 = vmul.f32 %v1169, %v1205
  %v1214 = vmul.f32 %v1171, %v1206
  %v1215 = vmul.f32 %v1173, %v1207
  %v1216 = vmul.f32 %v1175, %v1208
  %v1217 = vmul.f32 %v1177, %v1209
  %v1218 = vpack.c.bf16 %v1211, %v1210
  %v1219 = vpack.c.bf16 %v1213, %v1212
  %v1220 = vpack.c.bf16 %v1215, %v1214
  %v1221 = vpack.c.bf16 %v1217, %v1216
  %1222 = vrot.lane.b32.xlu0 %v1009, 64
  %v1223 = vpop.permute.xlu0 %1222
  %1224 = vrot.lane.b32.xlu0 %v1010, 64
  %v1225 = vpop.permute.xlu0 %1224
  %1226 = vrot.lane.b32.xlu0 %v1011, 64
  %v1227 = vpop.permute.xlu0 %1226
  %1228 = vrot.lane.b32.xlu0 %v1012, 64
  %v1229 = vpop.permute.xlu0 %1228
  %v1235 = vsel %vm69, %v1218, 0
  %v1238 = vsel %vm69, %v1219, 0
  %v1241 = vsel %vm69, %v1220, 0
  %v1244 = vsel %vm69, %v1221, 0
  %1246 = vmatprep.subr.bf16.mxu0 0
  %1247 = vmatpush1.bf16.msra.mxu0 %v1223
  %1248 = vmatprep.subr.bf16.mxu0 0
  %1249 = vmatpush1.bf16.msra.mxu0 %v1225
  %1250 = vmatprep.subr.bf16.mxu0 0
  %1251 = vmatpush1.bf16.msra.mxu0 %v1227
  %1252 = vmatprep.subr.bf16.mxu0 0
  %1253 = vmatpush1.bf16.msra.mxu0 %v1229
  %1254 = vmatprep.subr.bf16.mxu0 0
  %1255 = vmatpush1.bf16.msra.mxu0 0
  %1256 = vmatprep.subr.bf16.mxu0 0
  %1257 = vmatpush1.bf16.msra.mxu0 0
  %1258 = vmatprep.subr.bf16.mxu0 0
  %1259 = vmatpush1.bf16.msra.mxu0 0
  %1260 = vmatprep.subr.bf16.mxu0 0
  %1261 = vmatpush1.bf16.msra.mxu0 0
  %1262 = vmatprep.subr.bf16.mxu0 0
  %1263 = vmatpush1.bf16.msra.mxu0 0
  %1264 = vmatprep.subr.bf16.mxu0 0
  %1265 = vmatpush1.bf16.msra.mxu0 0
  %1266 = vmatprep.subr.bf16.mxu0 0
  %1267 = vmatpush1.bf16.msra.mxu0 0
  %1268 = vmatprep.subr.bf16.mxu0 0
  %1269 = vmatpush1.bf16.msra.mxu0 0
  %1270 = vmatprep.subr.bf16.mxu0 0
  %1271 = vmatpush1.bf16.msra.mxu0 0
  %1272 = vmatprep.subr.bf16.mxu0 0
  %1273 = vmatpush1.bf16.msra.mxu0 0
  %1274 = vmatprep.subr.bf16.mxu0 0
  %1275 = vmatpush1.bf16.msra.mxu0 0
  %1276 = vmatprep.subr.bf16.mxu0 0
  %1277 = vmatpush1.bf16.msra.mxu0 0
  %1278 = vmatprep.mubr.bf16.mxu0 0
  %1279 = vmatmul.mubr.bf16.gmra.mrb[0].mxu0 %v1235
  %v1280 = vpop.f32.mrb[0].mxu0
  %v1281 = vadd.f32 0.0, %v1280
  %v1282 = vpop.f32.mrb[0].mxu0
  %v1283 = vpop.f32.mrb[0].mxu0
  %v1284 = vadd.f32 0.0, %v1283
  %v1285 = vpop.f32.mrb[0].mxu0
  %1286 = vmatprep.mubr.bf16.mxu0 0
  %1287 = vmatmul.mubr.bf16.gmra.mrb[0].mxu0 %v1238
  %v1288 = vpop.f32.mrb[0].mxu0
  %v1289 = vadd.f32 0.0, %v1288
  %v1290 = vpop.f32.mrb[0].mxu0
  %v1291 = vpop.f32.mrb[0].mxu0
  %v1292 = vadd.f32 0.0, %v1291
  %v1293 = vpop.f32.mrb[0].mxu0
  %1294 = vmatprep.mubr.bf16.mxu0 0
  %1295 = vmatmul.mubr.bf16.gmra.mrb[0].mxu0 %v1241
  %v1296 = vpop.f32.mrb[0].mxu0
  %v1297 = vadd.f32 0.0, %v1296
  %v1298 = vpop.f32.mrb[0].mxu0
  %v1299 = vpop.f32.mrb[0].mxu0
  %v1300 = vadd.f32 0.0, %v1299
  %v1301 = vpop.f32.mrb[0].mxu0
  %1302 = vmatprep.mubr.bf16.mxu0 0
  %1303 = vmatmul.mubr.bf16.gmra.mrb[0].mxu0 %v1244
  %v1304 = vpop.f32.mrb[0].mxu0
  %v1305 = vadd.f32 0.0, %v1304
  %v1306 = vpop.f32.mrb[0].mxu0
  %v1307 = vpop.f32.mrb[0].mxu0
  %v1308 = vadd.f32 0.0, %v1307
  %v1309 = vpop.f32.mrb[0].mxu0
  %1310 = vdwg.mxu0
  %1313 = vrot.lane.b32.xlu0 %v1289, 8
  %v1314 = vpop.permute.xlu0 %1313
  %1315 = vrot.lane.b32.xlu0 %v1292, 8
  %v1316 = vpop.permute.xlu0 %1315
  %1321 = vrot.lane.b32.xlu0 %v1297, 16
  %v1322 = vpop.permute.xlu0 %1321
  %1323 = vrot.lane.b32.xlu0 %v1300, 16
  %v1324 = vpop.permute.xlu0 %1323
  %1329 = vrot.lane.b32.xlu0 %v1305, 24
  %v1330 = vpop.permute.xlu0 %1329
  %1331 = vrot.lane.b32.xlu0 %v1308, 24
  %v1332 = vpop.permute.xlu0 %1331
  %v1335 = vsel %vm304, %v1281, %v1314
  %v1336 = vsel %vm304, %v1284, %v1316
  %v1337 = vsel %vm124, %v1335, %v1322
  %v1338 = vsel %vm124, %v1336, %v1324
  %v1339 = vsel %vm619, %v1337, %v1330
  %v1340 = vsel %vm619, %v1338, %v1332
  %v1341 = vpack.c.bf16 %v1340, %v1339
  %v1342 = vlaneseq
  %v1343 = vshrl.u32 %v1342, 7
  %v1344 = vsub.s32 0, %v1343
  %v1345 = vrot.slane %v921, %v1344
  %v1350 = vunpack.c.l.b16 %v904
  %v1351 = vunpack.c.l.b16 %v905
  %v1352 = vunpack.c.l.b16 %v906
  %v1353 = vunpack.c.l.b16 %v907
  %v1354 = vpack.c.b16 %v1351, %v1350
  %v1355 = vpack.c.b16 %v1353, %v1352
  %v1359 = vsel %vm126, %v1341, 0
  %1361 = vmatprep.subr.bf16.mxu0 0
  %1362 = vmatpush1.bf16.msra.mxu0 %v1354
  %1363 = vmatprep.subr.bf16.mxu0 0
  %1364 = vmatpush1.bf16.msra.mxu0 %v1355
  %1365 = vmatprep.subr.bf16.mxu0 0
  %1366 = vmatpush1.bf16.msra.mxu0 0
  %1367 = vmatprep.subr.bf16.mxu0 0
  %1368 = vmatpush1.bf16.msra.mxu0 0
  %1369 = vmatprep.subr.bf16.mxu0 0
  %1370 = vmatpush1.bf16.msra.mxu0 0
  %1371 = vmatprep.subr.bf16.mxu0 0
  %1372 = vmatpush1.bf16.msra.mxu0 0
  %1373 = vmatprep.subr.bf16.mxu0 0
  %1374 = vmatpush1.bf16.msra.mxu0 0
  %1375 = vmatprep.subr.bf16.mxu0 0
  %1376 = vmatpush1.bf16.msra.mxu0 0
  %1377 = vmatprep.subr.bf16.mxu0 0
  %1378 = vmatpush1.bf16.msra.mxu0 0
  %1379 = vmatprep.subr.bf16.mxu0 0
  %1380 = vmatpush1.bf16.msra.mxu0 0
  %1381 = vmatprep.subr.bf16.mxu0 0
  %1382 = vmatpush1.bf16.msra.mxu0 0
  %1383 = vmatprep.subr.bf16.mxu0 0
  %1384 = vmatpush1.bf16.msra.mxu0 0
  %1385 = vmatprep.subr.bf16.mxu0 0
  %1386 = vmatpush1.bf16.msra.mxu0 0
  %1387 = vmatprep.subr.bf16.mxu0 0
  %1388 = vmatpush1.bf16.msra.mxu0 0
  %1389 = vmatprep.subr.bf16.mxu0 0
  %1390 = vmatpush1.bf16.msra.mxu0 0
  %1391 = vmatprep.subr.bf16.mxu0 0
  %1392 = vmatpush1.bf16.msra.mxu0 0
  %1393 = vmatprep.mubr.bf16.mxu0 0
  %1394 = vmatmul.mubr.bf16.gmra.mrb[0].mxu0 %v1359
  %v1395 = vpop.f32.mrb[0].mxu0
  %v1396 = vadd.f32 %v1345, %v1395
  %v1397 = vpop.f32.mrb[0].mxu0
  %v1398 = vpop.f32.mrb[0].mxu0
  %v1399 = vadd.f32 %v1345, %v1398
  %v1400 = vpop.f32.mrb[0].mxu0
  %1401 = vdwg.mxu0
  %v1402 = vadd.f32 %v898, %v1396
  %v1403 = vadd.f32 %v899, %v1399
  %v1404 = vsel %vm126, %v1402, 0.0
  %1405 = vadd.xlane.f32.xlu0 %v1404
  %v1406 = vpop.xlane.xlu0 %1405
  %v1407 = vsel %vm126, %v1403, 0.0
  %1408 = vadd.xlane.f32.xlu0 %v1407
  %v1409 = vpop.xlane.xlu0 %1408
  %v1410 = vmul.f32 %v1406, %v691
  %v1411 = vmul.f32 %v1409, %v691
  %v1412 = vsub.f32 %v1402, %v1410
  %v1413 = vsub.f32 %v1403, %v1411
  %v1414 = vmul.f32 %v1412, %v1412
  %v1415 = vmul.f32 %v1413, %v1413
  %v1416 = vsel %vm126, %v1414, 0.0
  %1417 = vadd.xlane.f32.xlu0 %v1416
  %v1418 = vpop.xlane.xlu0 %1417
  %v1419 = vsel %vm126, %v1415, 0.0
  %1420 = vadd.xlane.f32.xlu0 %v1419
  %v1421 = vpop.xlane.xlu0 %1420
  %v1422 = vmul.f32 %v1418, %v691
  %v1423 = vmul.f32 %v1421, %v691
  %v1424 = vadd.f32 %v1422, 1e-05
  %v1425 = vadd.f32 %v1423, 1e-05
  %v1426 = vrsqrt.pop %v1424
  %v1427 = vrsqrt.pop %v1425
  %v1428 = vmul.f32 %v1412, %v1426
  %v1429 = vmul.f32 %v1413, %v1427
  %v1430 = vlaneseq
  %v1431 = vshrl.u32 %v1430, 7
  %v1432 = vsub.s32 0, %v1431
  %v1433 = vrot.slane %v922, %v1432
  %v1434 = vmul.f32 %v1428, %v1433
  %v1435 = vmul.f32 %v1429, %v1433
  %v1436 = vlaneseq
  %v1437 = vshrl.u32 %v1436, 7
  %v1438 = vsub.s32 0, %v1437
  %v1439 = vrot.slane %v923, %v1438
  %v1440 = vadd.f32 %v1434, %v1439
  %v1441 = vadd.f32 %v1435, %v1439
  %v1442 = vpack.c.bf16 %v1441, %v1440
  %v1443 = vlaneseq
  %v1444 = vshrl.u32 %v1443, 7
  %v1445 = vsub.s32 0, %v1444
  %v1446 = vrot.slane %v924, %v1445
  %v1451 = vunpack.c.l.b16 %v908
  %v1452 = vunpack.c.l.b16 %v909
  %v1453 = vunpack.c.l.b16 %v910
  %v1454 = vunpack.c.l.b16 %v911
  %v1455 = vpack.c.b16 %v1452, %v1451
  %v1456 = vpack.c.b16 %v1454, %v1453
  %v1460 = vsel %vm126, %v1442, 0
  %1462 = vmatprep.subr.bf16.mxu0 0
  %1463 = vmatpush1.bf16.msra.mxu0 %v1455
  %1464 = vmatprep.subr.bf16.mxu0 0
  %1465 = vmatpush1.bf16.msra.mxu0 %v1456
  %1466 = vmatprep.subr.bf16.mxu0 0
  %1467 = vmatpush1.bf16.msra.mxu0 0
  %1468 = vmatprep.subr.bf16.mxu0 0
  %1469 = vmatpush1.bf16.msra.mxu0 0
  %1470 = vmatprep.subr.bf16.mxu0 0
  %1471 = vmatpush1.bf16.msra.mxu0 0
  %1472 = vmatprep.subr.bf16.mxu0 0
  %1473 = vmatpush1.bf16.msra.mxu0 0
  %1474 = vmatprep.subr.bf16.mxu0 0
  %1475 = vmatpush1.bf16.msra.mxu0 0
  %1476 = vmatprep.subr.bf16.mxu0 0
  %1477 = vmatpush1.bf16.msra.mxu0 0
  %1478 = vmatprep.subr.bf16.mxu0 0
  %1479 = vmatpush1.bf16.msra.mxu0 0
  %1480 = vmatprep.subr.bf16.mxu0 0
  %1481 = vmatpush1.bf16.msra.mxu0 0
  %1482 = vmatprep.subr.bf16.mxu0 0
  %1483 = vmatpush1.bf16.msra.mxu0 0
  %1484 = vmatprep.subr.bf16.mxu0 0
  %1485 = vmatpush1.bf16.msra.mxu0 0
  %1486 = vmatprep.subr.bf16.mxu0 0
  %1487 = vmatpush1.bf16.msra.mxu0 0
  %1488 = vmatprep.subr.bf16.mxu0 0
  %1489 = vmatpush1.bf16.msra.mxu0 0
  %1490 = vmatprep.subr.bf16.mxu0 0
  %1491 = vmatpush1.bf16.msra.mxu0 0
  %1492 = vmatprep.subr.bf16.mxu0 0
  %1493 = vmatpush1.bf16.msra.mxu0 0
  %1494 = vmatprep.mubr.bf16.mxu0 0
  %1495 = vmatmul.mubr.bf16.gmra.mrb[0].mxu0 %v1460
  %v1496 = vpop.f32.mrb[0].mxu0
  %v1497 = vadd.f32 %v1446, %v1496
  %v1498 = vpop.f32.mrb[0].mxu0
  %v1499 = vpop.f32.mrb[0].mxu0
  %v1500 = vadd.f32 %v1446, %v1499
  %v1501 = vpop.f32.mrb[0].mxu0
  %1502 = vdwg.mxu0
  %v1503 = vmax.f32 %v1497, 0.0
  %v1504 = vmax.f32 %v1500, 0.0
  %v1505 = vpack.c.bf16 %v1504, %v1503
  %v1506 = vlaneseq
  %v1507 = vshrl.u32 %v1506, 7
  %v1508 = vsub.s32 0, %v1507
  %v1509 = vrot.slane %v925, %v1508
  %v1518 = vunpack.c.l.b16 %v912
  %v1519 = vunpack.c.l.b16 %v913
  %v1520 = vunpack.c.l.b16 %v914
  %v1521 = vunpack.c.l.b16 %v915
  %v1522 = vunpack.c.l.b16 %v916
  %v1523 = vunpack.c.l.b16 %v917
  %v1524 = vunpack.c.l.b16 %v918
  %v1525 = vunpack.c.l.b16 %v919
  %v1526 = vpack.c.b16 %v1519, %v1518
  %v1527 = vpack.c.b16 %v1521, %v1520
  %v1528 = vpack.c.b16 %v1523, %v1522
  %v1529 = vpack.c.b16 %v1525, %v1524
  %v1535 = vsel %vm69, %v1505, 0
  %1537 = vmatprep.subr.bf16.mxu0 0
  %1538 = vmatpush1.bf16.msra.mxu0 %v1526
  %1539 = vmatprep.subr.bf16.mxu0 0
  %1540 = vmatpush1.bf16.msra.mxu0 %v1527
  %1541 = vmatprep.subr.bf16.mxu0 0
  %1542 = vmatpush1.bf16.msra.mxu0 %v1528
  %1543 = vmatprep.subr.bf16.mxu0 0
  %1544 = vmatpush1.bf16.msra.mxu0 %v1529
  %1545 = vmatprep.subr.bf16.mxu0 0
  %1546 = vmatpush1.bf16.msra.mxu0 0
  %1547 = vmatprep.subr.bf16.mxu0 0
  %1548 = vmatpush1.bf16.msra.mxu0 0
  %1549 = vmatprep.subr.bf16.mxu0 0
  %1550 = vmatpush1.bf16.msra.mxu0 0
  %1551 = vmatprep.subr.bf16.mxu0 0
  %1552 = vmatpush1.bf16.msra.mxu0 0
  %1553 = vmatprep.subr.bf16.mxu0 0
  %1554 = vmatpush1.bf16.msra.mxu0 0
  %1555 = vmatprep.subr.bf16.mxu0 0
  %1556 = vmatpush1.bf16.msra.mxu0 0
  %1557 = vmatprep.subr.bf16.mxu0 0
  %1558 = vmatpush1.bf16.msra.mxu0 0
  %1559 = vmatprep.subr.bf16.mxu0 0
  %1560 = vmatpush1.bf16.msra.mxu0 0
  %1561 = vmatprep.subr.bf16.mxu0 0
  %1562 = vmatpush1.bf16.msra.mxu0 0
  %1563 = vmatprep.subr.bf16.mxu0 0
  %1564 = vmatpush1.bf16.msra.mxu0 0
  %1565 = vmatprep.subr.bf16.mxu0 0
  %1566 = vmatpush1.bf16.msra.mxu0 0
  %1567 = vmatprep.subr.bf16.mxu0 0
  %1568 = vmatpush1.bf16.msra.mxu0 0
  %1569 = vmatprep.mubr.bf16.mxu0 0
  %1570 = vmatmul.mubr.bf16.gmra.mrb[0].mxu0 %v1535
  %v1571 = vpop.f32.mrb[0].mxu0
  %v1572 = vadd.f32 %v1509, %v1571
  %v1573 = vpop.f32.mrb[0].mxu0
  %v1574 = vpop.f32.mrb[0].mxu0
  %v1575 = vadd.f32 %v1509, %v1574
  %v1576 = vpop.f32.mrb[0].mxu0
  %1577 = vdwg.mxu0
  %v1578 = vadd.f32 %v1440, %v1572
  %v1579 = vadd.f32 %v1441, %v1575
  %v1580 = vsel %vm126, %v1578, 0.0
  %1581 = vadd.xlane.f32.xlu0 %v1580
  %v1582 = vpop.xlane.xlu0 %1581
  %v1583 = vsel %vm126, %v1579, 0.0
  %1584 = vadd.xlane.f32.xlu0 %v1583
  %v1585 = vpop.xlane.xlu0 %1584
  %v1586 = vmul.f32 %v1582, %v691
  %v1587 = vmul.f32 %v1585, %v691
  %v1588 = vsub.f32 %v1578, %v1586
  %v1589 = vsub.f32 %v1579, %v1587
  %v1590 = vmul.f32 %v1588, %v1588
  %v1591 = vmul.f32 %v1589, %v1589
  %v1592 = vsel %vm126, %v1590, 0.0
  %1593 = vadd.xlane.f32.xlu0 %v1592
  %v1594 = vpop.xlane.xlu0 %1593
  %v1595 = vsel %vm126, %v1591, 0.0
  %1596 = vadd.xlane.f32.xlu0 %v1595
  %v1597 = vpop.xlane.xlu0 %1596
  %v1598 = vmul.f32 %v1594, %v691
  %v1599 = vmul.f32 %v1597, %v691
  %v1600 = vadd.f32 %v1598, 1e-05
  %v1601 = vadd.f32 %v1599, 1e-05
  %v1602 = vrsqrt.pop %v1600
  %v1603 = vrsqrt.pop %v1601
  %v1604 = vmul.f32 %v1588, %v1602
  %v1605 = vmul.f32 %v1589, %v1603
  %v1606 = vlaneseq
  %v1607 = vshrl.u32 %v1606, 7
  %v1608 = vsub.s32 0, %v1607
  %v1609 = vrot.slane %v926, %v1608
  %v1610 = vmul.f32 %v1604, %v1609
  %v1611 = vmul.f32 %v1605, %v1609
  %v1612 = vlaneseq
  %v1613 = vshrl.u32 %v1612, 7
  %v1614 = vsub.s32 0, %v1613
  %v1615 = vrot.slane %v927, %v1614
  %v1616 = vadd.f32 %v1610, %v1615
  %v1617 = vadd.f32 %v1611, %v1615
  %v1618 = vld [vmem:[%s2 + $0x20] sm:$0x1]
  %v1619 = vld [vmem:[%s2 + $0x21] sm:$0x1]
  %v1620 = vlaneseq
  %v1621 = vshrl.u32 %v1620, 7
  %v1622 = vsub.s32 0, %v1621
  %v1623 = vrot.slane %v1618, %v1622
  %v1624 = vmul.f32 %v1616, %v1623
  %v1625 = vmul.f32 %v1617, %v1623
  %v1626 = vsel %vm126, %v1624, 0.0
  %1627 = vadd.xlane.f32.xlu0 %v1626
  %v1628 = vpop.xlane.xlu0 %1627
  %v1629 = vsel %vm126, %v1625, 0.0
  %1630 = vadd.xlane.f32.xlu0 %v1629
  %v1631 = vpop.xlane.xlu0 %1630
  %v1632 = vlaneseq
  %v1633 = vshrl.u32 %v1632, 7
  %v1634 = vsub.s32 0, %v1633
  %v1635 = vrot.slane %v1619, %v1634
  %v1636 = vadd.f32 %v1628, %v1635
  %v1637 = vadd.f32 %v1631, %v1635
  %v1638 = vand.u32 %v132, 7
  %v1639 = vand.u32 %v133, 7
  %vm1640 = vcmp.eq.s32.totalorder %v1638, 0
  %vm1641 = vcmp.eq.s32.totalorder %v1639, 0
  %v1642 = vsel %vm1640, 1, 0
  %v1643 = vsel %vm1641, 1, 0
  %v1644 = vcvt.s32.f32 %v1642
  %v1645 = vcvt.s32.f32 %v1643
  %v1646 = vmax.f32 %v1636, 0.0
  %v1647 = vmax.f32 %v1637, 0.0
  %v1648 = vmul.f32 %v1636, %v16
  %v1649 = vmul.f32 %v1637, %v17
  %v1650 = vsub.f32 %v1646, %v1648
  %v1651 = vsub.f32 %v1647, %v1649
  %v1652 = vand.u32 2147483647, %v1636
  %v1653 = vand.u32 2147483647, %v1637
  %v1654 = vsub.f32 0.0, %v1652
  %v1655 = vsub.f32 0.0, %v1653
  %v1656 = vmul.f32 %v1654, 1.442695
  %v1657 = vpow.pop %v1656
  %v1658 = vmul.f32 %v1655, 1.442695
  %v1659 = vpow.pop %v1658
  %v1660 = vadd.f32 %v1657, 1.0
  %v1661 = vadd.f32 %v1659, 1.0
  %v1662 = vlog2.pop %v1660
  %v1663 = vmul.f32 %v1662, 0.6931472
  %v1664 = vlog2.pop %v1661
  %v1665 = vmul.f32 %v1664, 0.6931472
  %v1666 = vadd.f32 %v1650, %v1663
  %v1667 = vadd.f32 %v1651, %v1665
  %v1668 = vmul.f32 %v1666, %v1644
  %v1669 = vmul.f32 %v1667, %v1645
  %vm1670 = vcmask 7168
  %v1671 = vsel %vm1670, %v1668, 0.0
  %v1672 = vsel %vm1670, %v1669, 0.0
  %v1673 = vadd.f32 %v1671, %v1672
  %1674 = vadd.xlane.f32.xlu0 %v1673
  %v1675 = vpop.xlane.xlu0 %1674
  %v1676 = vrot.slane %v1675, 4
  %v1677 = vadd.f32 %v1675, %v1676
  %v1678 = vrot.slane %v1677, 2
  %v1679 = vadd.f32 %v1677, %v1678
  %v1680 = vrot.slane %v1679, 1
  %v1681 = vadd.f32 %v1679, %v1680
  %s1682 = vtos %v1681
  %v1683 = vstv %s1682
  %v1684 = vmul.f32 %v1683, 0.5
  %1685 = vst.msk [vmem:[%s3] sm:$0xff] %vm1670, %v1636
  %1686 = vst.msk [vmem:[%s3 + $0x8] sm:$0xff] %vm1670, %v1637
  %vm1687 = vcmask 0
  %1688 = vst.msk [vmem:[%s3 + $0x10] sm:$0x1] %vm1687, %v1684
  // Predicated region
  $region14: #{discriminator_forward.1} parent=0 // pred_check
    _
  $region15: #{discriminator_forward.1} parent=0 // pred_check_branch
    %1690 = sbr.rel (0) target = $region17
  $region16: #{discriminator_forward.1} parent=0 // pred_region
    _
  $region17: #{discriminator_forward.1} parent=0 // pred_fallthru
    _
  // Predicated region
  $region18: #{discriminator_forward.1} parent=0 // pred_check
    _
  $region19: #{discriminator_forward.1} parent=0 // pred_check_branch
    %1692 = sbr.rel (0) target = $region21
  $region20: #{discriminator_forward.1} parent=0 // pred_region
    _
  $region21: #{discriminator_forward.1} parent=0 // pred_fallthru
    _

</llo_original>
